<compile_context>
chip_gen: v6e
topology: v6e:2x2x1
jax: 0.10.0
libtpu: 0.0.40
codegen_flags: <defaults>
</compile_context>

<pallas_src>
import functools

import jax
import jax.numpy as jnp
from jax import lax
from jax.experimental import pallas as pl
from jax.experimental.pallas import tpu as pltpu


# -----------------------------------------------------------------------------
# Pallas kernel: one ResidualRNN block (LayerNorm + biLSTM + Linear + residual)
# -----------------------------------------------------------------------------
def residual_rnn_kernel(z_ref, gamma_ref, beta_ref, wih_ref, whh_ref, b_ref,
                        wfc_ref, bfc_ref, o_ref, gxf_ref, gxb_ref):
    S, nb, E = z_ref.shape
    H4 = whh_ref.shape[-1]
    H = H4 // 4
    cdt = wih_ref.dtype                                  # MXU operand dtype

    # ---- LayerNorm over emb_dim (f32, eps = 1e-5, matches nn.LayerNorm) ----
    z0 = z_ref[...]                                      # (S, nb, E) f32
    mean = jnp.mean(z0, axis=-1, keepdims=True)
    var = jnp.mean(jnp.square(z0 - mean), axis=-1, keepdims=True)
    xn = (z0 - mean) * lax.rsqrt(var + 1e-5)
    xn = xn * gamma_ref[...].reshape(1, 1, E) + beta_ref[...].reshape(1, 1, E)

    # ---- hoisted input projection: all timesteps, all gates, both dirs -----
    xn2 = xn.reshape(S * nb, E).astype(cdt)
    gxf = jnp.dot(xn2, wih_ref[0], preferred_element_type=jnp.float32) + b_ref[0]
    gxb = jnp.dot(xn2, wih_ref[1], preferred_element_type=jnp.float32) + b_ref[1]
    gxf_ref[...] = gxf.reshape(S, nb, H4).astype(gxf_ref.dtype)
    gxb_ref[...] = gxb.reshape(S, nb, H4).astype(gxb_ref.dtype)

    # ---- residual + fc bias initialise the output accumulator --------------
    o_ref[...] = z0 + bfc_ref[...].reshape(1, 1, E)

    # ---- interleaved bidirectional LSTM recurrence + fused FC accumulation -
    # PyTorch gate order: i, f, g, o laid out contiguously on the 4H lane axis.
    def cell(pre, c):
        i = jax.nn.sigmoid(pre[:, 0 * H:1 * H])
        f = jax.nn.sigmoid(pre[:, 1 * H:2 * H])
        g = jnp.tanh(pre[:, 2 * H:3 * H])
        o = jax.nn.sigmoid(pre[:, 3 * H:4 * H])
        c_new = f * c + i * g
        h_new = o * jnp.tanh(c_new)
        return h_new, c_new

    def step(s, carry):
        hf, cf, hb, cb = carry
        tf = s                                           # forward time index
        tb = S - 1 - s                                   # backward time index

        pre_f = gxf_ref[tf].astype(jnp.float32) + jnp.dot(
            hf.astype(cdt), whh_ref[0], preferred_element_type=jnp.float32)
        pre_b = gxb_ref[tb].astype(jnp.float32) + jnp.dot(
            hb.astype(cdt), whh_ref[1], preferred_element_type=jnp.float32)

        hf_new, cf_new = cell(pre_f, cf)
        hb_new, cb_new = cell(pre_b, cb)

        # fold the FC projection into the recurrence (free MXU filler)
        o_ref[tf] = o_ref[tf] + jnp.dot(
            hf_new.astype(cdt), wfc_ref[0], preferred_element_type=jnp.float32)
        o_ref[tb] = o_ref[tb] + jnp.dot(
            hb_new.astype(cdt), wfc_ref[1], preferred_element_type=jnp.float32)

        return (hf_new, cf_new, hb_new, cb_new)

    zeros = jnp.zeros((nb, H), jnp.float32)
    lax.fori_loop(0, S, step, (zeros, zeros, zeros, zeros))


# -----------------------------------------------------------------------------
# Wrappers
# -----------------------------------------------------------------------------
def _round_up(x, m):
    return (x + m - 1) // m * m


def _pick_nb(N, A, E, H, cdtype_size, budget_bytes=40 * 1024 * 1024):
    """Largest batch tile (<=128) whose VMEM footprint fits the budget."""
    nb = min(128, _round_up(N, 8))

    def vmem(nb_):
        slab = A * nb_ * E * 4                 # one (A, nb, E) f32 buffer
        gx = A * nb_ * 4 * H * cdtype_size     # one direction's gate scratch
        return 4 * slab + 2 * gx               # dbl-buffered in+out + scratch

    while nb > 8 and vmem(nb) > budget_bytes:
        nb = max(8, _round_up(nb // 2, 8))
    return nb


def residual_rnn_apply(z, p, compute_dtype=jnp.bfloat16):
    """z: (B, U, A, E) -> (B, U, A, E). LSTM runs along axis A ('across')."""
    B, U, A, E = z.shape
    H = p["whh"].shape[1]
    N = B * U
    csz = jnp.dtype(compute_dtype).itemsize
    nb = _pick_nb(N, A, E, H, csz)
    Np = _round_up(N, nb)

    x = z.reshape(N, A, E).transpose(1, 0, 2)            # (A, N, E)
    if Np != N:
        x = jnp.pad(x, ((0, 0), (0, Np - N), (0, 0)))    # pad batch tiles

    wih = p["wih"].astype(compute_dtype)                 # (2, E, 4H)
    whh = p["whh"].astype(compute_dtype)                 # (2, H, 4H)
    wfc = p["wfc"].astype(compute_dtype)                 # (2, H, E)

    out = pl.pallas_call(
        residual_rnn_kernel,
        out_shape=jax.ShapeDtypeStruct((A, Np, E), jnp.float32),
        grid_spec=pltpu.PrefetchScalarGridSpec(
            num_scalar_prefetch=0,
            grid=(Np // nb,),
            in_specs=[
                pl.BlockSpec((A, nb, E), lambda n: (0, n, 0)),        # z slab
                pl.BlockSpec((1, E), lambda n: (0, 0)),               # gamma
                pl.BlockSpec((1, E), lambda n: (0, 0)),               # beta
                pl.BlockSpec((2, E, 4 * H), lambda n: (0, 0, 0)),     # W_ih^T fused
                pl.BlockSpec((2, H, 4 * H), lambda n: (0, 0, 0)),     # W_hh^T fused
                pl.BlockSpec((2, 1, 4 * H), lambda n: (0, 0, 0)),     # b_ih + b_hh
                pl.BlockSpec((2, H, E), lambda n: (0, 0, 0)),         # fc weight split
                pl.BlockSpec((1, E), lambda n: (0, 0)),               # fc bias
            ],
            out_specs=pl.BlockSpec((A, nb, E), lambda n: (0, n, 0)),
            scratch_shapes=[
                pltpu.VMEM((A, nb, 4 * H), compute_dtype),   # fwd gate inputs
                pltpu.VMEM((A, nb, 4 * H), compute_dtype),   # bwd gate inputs
            ],
        ),
        compiler_params=pltpu.CompilerParams(
            dimension_semantics=("parallel",),               # v7x megacore
            vmem_limit_bytes=64 * 1024 * 1024,
        ),
    )(x, p["gamma"], p["beta"], wih, whh, p["b"], wfc, p["bfc"])

    out = out[:, :N, :]
    return out.transpose(1, 0, 2).reshape(B, U, A, E)


def seq_band_modelling(z, params, compute_dtype=jnp.bfloat16):
    """SeqBandModellingModule.forward, parallel_mode=False."""
    for p in params:
        z = residual_rnn_apply(z, p, compute_dtype)
        z = jnp.swapaxes(z, 1, 2)
    return z


# -----------------------------------------------------------------------------
# Pure-JAX reference (numerical sanity check)
# -----------------------------------------------------------------------------
def residual_rnn_ref(z, p):
    B, U, A, E = z.shape
    H = p["whh"].shape[1]
    z0 = z
    mean = jnp.mean(z, -1, keepdims=True)
    var = jnp.mean((z - mean) ** 2, -1, keepdims=True)
    xn = (z - mean) / jnp.sqrt(var + 1e-5) * p["gamma"][0] + p["beta"][0]
    x = xn.reshape(B * U, A, E)

    def lstm_dir(x, d, reverse):
        N = x.shape[0]

        def step(carry, x_t):
            h, c = carry
            g = x_t @ p["wih"][d] + h @ p["whh"][d] + p["b"][d]
            i = jax.nn.sigmoid(g[:, 0 * H:1 * H])
            f = jax.nn.sigmoid(g[:, 1 * H:2 * H])
            gg = jnp.tanh(g[:, 2 * H:3 * H])
            o = jax.nn.sigmoid(g[:, 3 * H:4 * H])
            c = f * c + i * gg
            h = o * jnp.tanh(c)
            return (h, c), h

        xs = x.transpose(1, 0, 2)
        if reverse:
            xs = xs[::-1]
        _, hs = lax.scan(step, (jnp.zeros((N, H)), jnp.zeros((N, H))), xs)
        if reverse:
            hs = hs[::-1]
        return hs.transpose(1, 0, 2)

    hf = lstm_dir(x, 0, False)
    hb = lstm_dir(x, 1, True)
    y = hf @ p["wfc"][0] + hb @ p["wfc"][1] + p["bfc"][0]
    return y.reshape(B, U, A, E) + z0


def seq_band_modelling_ref(z, params):
    for p in params:
        z = residual_rnn_ref(z, p)
        z = jnp.swapaxes(z, 1, 2)
    return z


# -----------------------------------------------------------------------------
# Deterministic parameter init (lane-dense fused layout; gate order i,f,g,o)
# -----------------------------------------------------------------------------
def init_params(key, n_layers, emb_dim, rnn_dim, scale=0.1):
    H = rnn_dim
    params = []
    for _ in range(n_layers):
        key, k1, k2, k3, k4, k5 = jax.random.split(key, 6)
        params.append(dict(
            gamma=jnp.ones((1, emb_dim), jnp.float32),
            beta=jnp.zeros((1, emb_dim), jnp.float32),
            # wih[d] == torch weight_ih(dir d).T, gates concat on the lane axis
            wih=scale * jax.random.normal(k1, (2, emb_dim, 4 * H), jnp.float32),
            whh=scale * jax.random.normal(k2, (2, H, 4 * H), jnp.float32),
            b=scale * jax.random.normal(k3, (2, 1, 4 * H), jnp.float32),   # b_ih+b_hh
            # fc weight (E, 2H) split per direction and transposed: (2, H, E)
            wfc=scale * jax.random.normal(k4, (2, H, emb_dim), jnp.float32),
            bfc=scale * jax.random.normal(k5, (1, emb_dim), jnp.float32),
        ))
    return params


# -----------------------------------------------------------------------------
if __name__ == "__main__":
    # Small, shape-consistent config: z is (batch, n_time, n_bands, emb_dim)
    n_modules = 2          # -> 2 * n_modules = 4 ResidualRNN blocks
    emb_dim = 32
    rnn_dim = 32
    B, T, Fbands = 2, 8, 8

    key = jax.random.PRNGKey(0)
    kz, kp = jax.random.split(key)
    z = jax.random.normal(kz, (B, T, Fbands, emb_dim), jnp.float32)
    params = init_params(kp, 2 * n_modules, emb_dim, rnn_dim)

    q_ref = seq_band_modelling_ref(z, params)

    # Exact-semantics check: f32 MXU operands (tight tolerance).
    fwd_f32 = jax.jit(functools.partial(
        seq_band_modelling, params=params, compute_dtype=jnp.float32))
    q32 = jax.block_until_ready(fwd_f32(z))
    assert q32.shape == (B, T, Fbands, emb_dim)
    assert jnp.allclose(q32, q_ref, rtol=1e-3, atol=1e-3), (
        float(jnp.max(jnp.abs(q32 - q_ref))))

    # Fast path: bf16 MXU operands (LN stats / cell state / residual stay f32).
    fwd_bf16 = jax.jit(functools.partial(
        seq_band_modelling, params=params, compute_dtype=jnp.bfloat16))
    qbf = jax.block_until_ready(fwd_bf16(z))
    assert jnp.allclose(qbf, q_ref, rtol=5e-2, atol=5e-2), (
        float(jnp.max(jnp.abs(qbf - q_ref))))

    print("KERNEL_OK")
</pallas_src>

<mosaic_0001>
module attributes {stable_mosaic.version = 11 : i64} {
  func.func @residual_rnn_kernel(%arg0: i32, %arg1: memref<8x16x32xf32, #tpu.memory_space<vmem>>, %arg2: memref<1x32xf32, #tpu.memory_space<vmem>>, %arg3: memref<1x32xf32, #tpu.memory_space<vmem>>, %arg4: memref<2x32x128xf32, #tpu.memory_space<vmem>>, %arg5: memref<2x32x128xf32, #tpu.memory_space<vmem>>, %arg6: memref<2x1x128xf32, #tpu.memory_space<vmem>>, %arg7: memref<2x32x32xf32, #tpu.memory_space<vmem>>, %arg8: memref<1x32xf32, #tpu.memory_space<vmem>>, %arg9: memref<8x16x32xf32, #tpu.memory_space<vmem>>, %arg10: memref<8x16x128xf32, #tpu.memory_space<vmem>>, %arg11: memref<8x16x128xf32, #tpu.memory_space<vmem>>) attributes {dimension_semantics = [#tpu.dimension_semantics<parallel>], iteration_bounds = array<i64: 1>, scalar_prefetch = 0 : i64, scratch_operands = 2 : i64, tpu.core_type = #tpu.core_type<tc>, window_params = [{transform_indices = @transform_0, window_bounds = array<i64: 8, 16, 32>}, {pipeline_mode = #tpu.pipeline_mode<synchronous>, transform_indices = @transform_1, window_bounds = array<i64: 1, 32>}, {pipeline_mode = #tpu.pipeline_mode<synchronous>, transform_indices = @transform_2, window_bounds = array<i64: 1, 32>}, {pipeline_mode = #tpu.pipeline_mode<synchronous>, transform_indices = @transform_3, window_bounds = array<i64: 2, 32, 128>}, {pipeline_mode = #tpu.pipeline_mode<synchronous>, transform_indices = @transform_4, window_bounds = array<i64: 2, 32, 128>}, {pipeline_mode = #tpu.pipeline_mode<synchronous>, transform_indices = @transform_5, window_bounds = array<i64: 2, 1, 128>}, {pipeline_mode = #tpu.pipeline_mode<synchronous>, transform_indices = @transform_6, window_bounds = array<i64: 2, 32, 32>}, {pipeline_mode = #tpu.pipeline_mode<synchronous>, transform_indices = @transform_7, window_bounds = array<i64: 1, 32>}, {transform_indices = @transform_8, window_bounds = array<i64: 8, 16, 32>}]} {
    %c0 = arith.constant 0 : index
    %c0_0 = arith.constant 0 : index
    %c0_1 = arith.constant 0 : index
    %0 = vector.load %arg1[%c0, %c0_0, %c0_1] : memref<8x16x32xf32, #tpu.memory_space<vmem>>, vector<8x16x32xf32>
    %cst = arith.constant dense<0.000000e+00> : vector<8x16xf32>
    %1 = vector.multi_reduction <add>, %0, %cst [2] : vector<8x16x32xf32> to vector<8x16xf32>
    %2 = vector.shape_cast %1 : vector<8x16xf32> to vector<8x16x1xf32>
    %cst_2 = arith.constant 3.200000e+01 : f32
    %3 = vector.broadcast %cst_2 : f32 to vector<8x16x1xf32>
    %4 = arith.divf %2, %3 : vector<8x16x1xf32>
    %5 = vector.broadcast %4 : vector<8x16x1xf32> to vector<8x16x32xf32>
    %6 = arith.subf %0, %5 : vector<8x16x32xf32>
    %7 = arith.mulf %6, %6 : vector<8x16x32xf32>
    %cst_3 = arith.constant dense<0.000000e+00> : vector<8x16xf32>
    %8 = vector.multi_reduction <add>, %7, %cst_3 [2] : vector<8x16x32xf32> to vector<8x16xf32>
    %9 = vector.shape_cast %8 : vector<8x16xf32> to vector<8x16x1xf32>
    %cst_4 = arith.constant 3.200000e+01 : f32
    %10 = vector.broadcast %cst_4 : f32 to vector<8x16x1xf32>
    %11 = arith.divf %9, %10 : vector<8x16x1xf32>
    %12 = vector.broadcast %4 : vector<8x16x1xf32> to vector<8x16x32xf32>
    %13 = arith.subf %0, %12 : vector<8x16x32xf32>
    %cst_5 = arith.constant 9.99999974E-6 : f32
    %14 = vector.broadcast %cst_5 : f32 to vector<8x16x1xf32>
    %15 = arith.addf %11, %14 : vector<8x16x1xf32>
    %16 = math.rsqrt %15 : vector<8x16x1xf32>
    %17 = vector.broadcast %16 : vector<8x16x1xf32> to vector<8x16x32xf32>
    %18 = arith.mulf %13, %17 : vector<8x16x32xf32>
    %c0_6 = arith.constant 0 : index
    %c0_7 = arith.constant 0 : index
    %19 = vector.load %arg2[%c0_6, %c0_7] : memref<1x32xf32, #tpu.memory_space<vmem>>, vector<1x32xf32>
    %20 = vector.shape_cast %19 : vector<1x32xf32> to vector<1x1x32xf32>
    %21 = vector.broadcast %20 : vector<1x1x32xf32> to vector<8x16x32xf32>
    %22 = arith.mulf %18, %21 : vector<8x16x32xf32>
    %c0_8 = arith.constant 0 : index
    %c0_9 = arith.constant 0 : index
    %23 = vector.load %arg3[%c0_8, %c0_9] : memref<1x32xf32, #tpu.memory_space<vmem>>, vector<1x32xf32>
    %24 = vector.shape_cast %23 : vector<1x32xf32> to vector<1x1x32xf32>
    %25 = vector.broadcast %24 : vector<1x1x32xf32> to vector<8x16x32xf32>
    %26 = arith.addf %22, %25 : vector<8x16x32xf32>
    %27 = vector.shape_cast %26 : vector<8x16x32xf32> to vector<128x32xf32>
    %c0_10 = arith.constant 0 : index
    %c0_11 = arith.constant 0 : index
    %c0_12 = arith.constant 0 : index
    %28 = vector.load %arg4[%c0_10, %c0_11, %c0_12] : memref<2x32x128xf32, #tpu.memory_space<vmem>>, vector<1x32x128xf32>
    %29 = vector.shape_cast %28 : vector<1x32x128xf32> to vector<32x128xf32>
    %cst_13 = arith.constant dense<0.000000e+00> : vector<128x128xf32>
    %30 = tpu.matmul %27, %29, %cst_13 {dimension_numbers = #tpu.dot_dimension_numbers<[1], [0], [0], [1], [0, 0, 1, 1], [], []>} : vector<128x32xf32>, vector<32x128xf32>, vector<128x128xf32> -> vector<128x128xf32>
    %c0_14 = arith.constant 0 : index
    %c0_15 = arith.constant 0 : index
    %c0_16 = arith.constant 0 : index
    %31 = vector.load %arg6[%c0_14, %c0_15, %c0_16] : memref<2x1x128xf32, #tpu.memory_space<vmem>>, vector<1x1x128xf32>
    %32 = vector.shape_cast %31 : vector<1x1x128xf32> to vector<1x128xf32>
    %33 = vector.broadcast %32 : vector<1x128xf32> to vector<128x128xf32>
    %34 = arith.addf %30, %33 : vector<128x128xf32>
    %c1 = arith.constant 1 : index
    %c0_17 = arith.constant 0 : index
    %c0_18 = arith.constant 0 : index
    %35 = vector.load %arg4[%c1, %c0_17, %c0_18] : memref<2x32x128xf32, #tpu.memory_space<vmem>>, vector<1x32x128xf32>
    %36 = vector.shape_cast %35 : vector<1x32x128xf32> to vector<32x128xf32>
    %cst_19 = arith.constant dense<0.000000e+00> : vector<128x128xf32>
    %37 = tpu.matmul %27, %36, %cst_19 {dimension_numbers = #tpu.dot_dimension_numbers<[1], [0], [0], [1], [0, 0, 1, 1], [], []>} : vector<128x32xf32>, vector<32x128xf32>, vector<128x128xf32> -> vector<128x128xf32>
    %c1_20 = arith.constant 1 : index
    %c0_21 = arith.constant 0 : index
    %c0_22 = arith.constant 0 : index
    %38 = vector.load %arg6[%c1_20, %c0_21, %c0_22] : memref<2x1x128xf32, #tpu.memory_space<vmem>>, vector<1x1x128xf32>
    %39 = vector.shape_cast %38 : vector<1x1x128xf32> to vector<1x128xf32>
    %40 = vector.broadcast %39 : vector<1x128xf32> to vector<128x128xf32>
    %41 = arith.addf %37, %40 : vector<128x128xf32>
    %42 = vector.shape_cast %34 : vector<128x128xf32> to vector<8x16x128xf32>
    %c0_23 = arith.constant 0 : index
    %c0_24 = arith.constant 0 : index
    %c0_25 = arith.constant 0 : index
    %43 = vector.load %arg10[%c0_23, %c0_24, %c0_25] : memref<8x16x128xf32, #tpu.memory_space<vmem>>, vector<8x16x128xf32>
    tpu.vector_store %arg10[%c0_23, %c0_24, %c0_25], %42 {strides = array<i32>} : memref<8x16x128xf32, #tpu.memory_space<vmem>>, vector<8x16x128xf32>,
    %44 = vector.shape_cast %41 : vector<128x128xf32> to vector<8x16x128xf32>
    %c0_26 = arith.constant 0 : index
    %c0_27 = arith.constant 0 : index
    %c0_28 = arith.constant 0 : index
    %45 = vector.load %arg11[%c0_26, %c0_27, %c0_28] : memref<8x16x128xf32, #tpu.memory_space<vmem>>, vector<8x16x128xf32>
    tpu.vector_store %arg11[%c0_26, %c0_27, %c0_28], %44 {strides = array<i32>} : memref<8x16x128xf32, #tpu.memory_space<vmem>>, vector<8x16x128xf32>,
    %c0_29 = arith.constant 0 : index
    %c0_30 = arith.constant 0 : index
    %46 = vector.load %arg8[%c0_29, %c0_30] : memref<1x32xf32, #tpu.memory_space<vmem>>, vector<1x32xf32>
    %47 = vector.shape_cast %46 : vector<1x32xf32> to vector<1x1x32xf32>
    %48 = vector.broadcast %47 : vector<1x1x32xf32> to vector<8x16x32xf32>
    %49 = arith.addf %0, %48 : vector<8x16x32xf32>
    %c0_31 = arith.constant 0 : index
    %c0_32 = arith.constant 0 : index
    %c0_33 = arith.constant 0 : index
    %50 = vector.load %arg9[%c0_31, %c0_32, %c0_33] : memref<8x16x32xf32, #tpu.memory_space<vmem>>, vector<8x16x32xf32>
    tpu.vector_store %arg9[%c0_31, %c0_32, %c0_33], %49 {strides = array<i32>} : memref<8x16x32xf32, #tpu.memory_space<vmem>>, vector<8x16x32xf32>,
    %cst_34 = arith.constant 0.000000e+00 : f32
    %51 = vector.broadcast %cst_34 : f32 to vector<16x32xf32>
    %c0_i32 = arith.constant 0 : i32
    %c8_i32 = arith.constant 8 : i32
    %52 = arith.addi %c0_i32, %c8_i32 : i32
    %c1_i32 = arith.constant 1 : i32
    %53:4 = scf.for %arg12 = %c0_i32 to %52 step %c1_i32 iter_args(%arg13 = %51, %arg14 = %51, %arg15 = %51, %arg16 = %51) -> (vector<16x32xf32>, vector<16x32xf32>, vector<16x32xf32>, vector<16x32xf32>)  : i32 {
      %c7_i32 = arith.constant 7 : i32
      %54 = arith.subi %c7_i32, %arg12 : i32
      %55 = arith.index_cast %arg12 : i32 to index
      %c0_36 = arith.constant 0 : index
      %c0_37 = arith.constant 0 : index
      %56 = vector.load %arg10[%55, %c0_36, %c0_37] : memref<8x16x128xf32, #tpu.memory_space<vmem>>, vector<1x16x128xf32>
      %57 = vector.shape_cast %56 : vector<1x16x128xf32> to vector<16x128xf32>
      %c0_38 = arith.constant 0 : index
      %c0_39 = arith.constant 0 : index
      %c0_40 = arith.constant 0 : index
      %58 = vector.load %arg5[%c0_38, %c0_39, %c0_40] : memref<2x32x128xf32, #tpu.memory_space<vmem>>, vector<1x32x128xf32>
      %59 = vector.shape_cast %58 : vector<1x32x128xf32> to vector<32x128xf32>
      %cst_41 = arith.constant dense<0.000000e+00> : vector<16x128xf32>
      %60 = tpu.matmul %arg13, %59, %cst_41 {dimension_numbers = #tpu.dot_dimension_numbers<[1], [0], [0], [1], [0, 0, 1, 1], [], []>} : vector<16x32xf32>, vector<32x128xf32>, vector<16x128xf32> -> vector<16x128xf32>
      %61 = arith.addf %57, %60 : vector<16x128xf32>
      %62 = arith.index_cast %54 : i32 to index
      %c0_42 = arith.constant 0 : index
      %c0_43 = arith.constant 0 : index
      %63 = vector.load %arg11[%62, %c0_42, %c0_43] : memref<8x16x128xf32, #tpu.memory_space<vmem>>, vector<1x16x128xf32>
      %64 = vector.shape_cast %63 : vector<1x16x128xf32> to vector<16x128xf32>
      %c1_44 = arith.constant 1 : index
      %c0_45 = arith.constant 0 : index
      %c0_46 = arith.constant 0 : index
      %65 = vector.load %arg5[%c1_44, %c0_45, %c0_46] : memref<2x32x128xf32, #tpu.memory_space<vmem>>, vector<1x32x128xf32>
      %66 = vector.shape_cast %65 : vector<1x32x128xf32> to vector<32x128xf32>
      %cst_47 = arith.constant dense<0.000000e+00> : vector<16x128xf32>
      %67 = tpu.matmul %arg15, %66, %cst_47 {dimension_numbers = #tpu.dot_dimension_numbers<[1], [0], [0], [1], [0, 0, 1, 1], [], []>} : vector<16x32xf32>, vector<32x128xf32>, vector<16x128xf32> -> vector<16x128xf32>
      %68 = arith.addf %64, %67 : vector<16x128xf32>
      %69 = vector.extract_strided_slice %61 {offsets = [0, 0], sizes = [16, 32], strides = [1, 1]} : vector<16x128xf32> to vector<16x32xf32>
      %70 = arith.negf %69 : vector<16x32xf32>
      %71 = math.exp %70 : vector<16x32xf32>
      %cst_48 = arith.constant 1.000000e+00 : f32
      %72 = vector.broadcast %cst_48 : f32 to vector<16x32xf32>
      %73 = arith.addf %72, %71 : vector<16x32xf32>
      %74 = arith.divf %72, %73 : vector<16x32xf32>
      %75 = vector.extract_strided_slice %61 {offsets = [0, 32], sizes = [16, 32], strides = [1, 1]} : vector<16x128xf32> to vector<16x32xf32>
      %76 = arith.negf %75 : vector<16x32xf32>
      %77 = math.exp %76 : vector<16x32xf32>
      %cst_49 = arith.constant 1.000000e+00 : f32
      %78 = vector.broadcast %cst_49 : f32 to vector<16x32xf32>
      %79 = arith.addf %78, %77 : vector<16x32xf32>
      %80 = arith.divf %78, %79 : vector<16x32xf32>
      %81 = vector.extract_strided_slice %61 {offsets = [0, 64], sizes = [16, 32], strides = [1, 1]} : vector<16x128xf32> to vector<16x32xf32>
      %82 = math.tanh %81 : vector<16x32xf32>
      %83 = vector.extract_strided_slice %61 {offsets = [0, 96], sizes = [16, 32], strides = [1, 1]} : vector<16x128xf32> to vector<16x32xf32>
      %84 = arith.negf %83 : vector<16x32xf32>
      %85 = math.exp %84 : vector<16x32xf32>
      %cst_50 = arith.constant 1.000000e+00 : f32
      %86 = vector.broadcast %cst_50 : f32 to vector<16x32xf32>
      %87 = arith.addf %86, %85 : vector<16x32xf32>
      %88 = arith.divf %86, %87 : vector<16x32xf32>
      %89 = arith.mulf %80, %arg14 : vector<16x32xf32>
      %90 = arith.mulf %74, %82 : vector<16x32xf32>
      %91 = arith.addf %89, %90 : vector<16x32xf32>
      %92 = math.tanh %91 : vector<16x32xf32>
      %93 = arith.mulf %88, %92 : vector<16x32xf32>
      %94 = vector.extract_strided_slice %68 {offsets = [0, 0], sizes = [16, 32], strides = [1, 1]} : vector<16x128xf32> to vector<16x32xf32>
      %95 = arith.negf %94 : vector<16x32xf32>
      %96 = math.exp %95 : vector<16x32xf32>
      %cst_51 = arith.constant 1.000000e+00 : f32
      %97 = vector.broadcast %cst_51 : f32 to vector<16x32xf32>
      %98 = arith.addf %97, %96 : vector<16x32xf32>
      %99 = arith.divf %97, %98 : vector<16x32xf32>
      %100 = vector.extract_strided_slice %68 {offsets = [0, 32], sizes = [16, 32], strides = [1, 1]} : vector<16x128xf32> to vector<16x32xf32>
      %101 = arith.negf %100 : vector<16x32xf32>
      %102 = math.exp %101 : vector<16x32xf32>
      %cst_52 = arith.constant 1.000000e+00 : f32
      %103 = vector.broadcast %cst_52 : f32 to vector<16x32xf32>
      %104 = arith.addf %103, %102 : vector<16x32xf32>
      %105 = arith.divf %103, %104 : vector<16x32xf32>
      %106 = vector.extract_strided_slice %68 {offsets = [0, 64], sizes = [16, 32], strides = [1, 1]} : vector<16x128xf32> to vector<16x32xf32>
      %107 = math.tanh %106 : vector<16x32xf32>
      %108 = vector.extract_strided_slice %68 {offsets = [0, 96], sizes = [16, 32], strides = [1, 1]} : vector<16x128xf32> to vector<16x32xf32>
      %109 = arith.negf %108 : vector<16x32xf32>
      %110 = math.exp %109 : vector<16x32xf32>
      %cst_53 = arith.constant 1.000000e+00 : f32
      %111 = vector.broadcast %cst_53 : f32 to vector<16x32xf32>
      %112 = arith.addf %111, %110 : vector<16x32xf32>
      %113 = arith.divf %111, %112 : vector<16x32xf32>
      %114 = arith.mulf %105, %arg16 : vector<16x32xf32>
      %115 = arith.mulf %99, %107 : vector<16x32xf32>
      %116 = arith.addf %114, %115 : vector<16x32xf32>
      %117 = math.tanh %116 : vector<16x32xf32>
      %118 = arith.mulf %113, %117 : vector<16x32xf32>
      %119 = arith.index_cast %arg12 : i32 to index
      %c0_54 = arith.constant 0 : index
      %c0_55 = arith.constant 0 : index
      %120 = vector.load %arg9[%119, %c0_54, %c0_55] : memref<8x16x32xf32, #tpu.memory_space<vmem>>, vector<1x16x32xf32>
      %121 = vector.shape_cast %120 : vector<1x16x32xf32> to vector<16x32xf32>
      %c0_56 = arith.constant 0 : index
      %c0_57 = arith.constant 0 : index
      %c0_58 = arith.constant 0 : index
      %122 = vector.load %arg7[%c0_56, %c0_57, %c0_58] : memref<2x32x32xf32, #tpu.memory_space<vmem>>, vector<1x32x32xf32>
      %123 = vector.shape_cast %122 : vector<1x32x32xf32> to vector<32x32xf32>
      %cst_59 = arith.constant dense<0.000000e+00> : vector<16x32xf32>
      %124 = tpu.matmul %93, %123, %cst_59 {dimension_numbers = #tpu.dot_dimension_numbers<[1], [0], [0], [1], [0, 0, 1, 1], [], []>} : vector<16x32xf32>, vector<32x32xf32>, vector<16x32xf32> -> vector<16x32xf32>
      %125 = arith.addf %121, %124 : vector<16x32xf32>
      %126 = arith.index_cast %arg12 : i32 to index
      %c0_60 = arith.constant 0 : index
      %c0_61 = arith.constant 0 : index
      %127 = vector.load %arg9[%126, %c0_60, %c0_61] : memref<8x16x32xf32, #tpu.memory_space<vmem>>, vector<1x16x32xf32>
      %128 = vector.shape_cast %127 : vector<1x16x32xf32> to vector<16x32xf32>
      %129 = vector.shape_cast %125 : vector<16x32xf32> to vector<1x16x32xf32>
      tpu.vector_store %arg9[%126, %c0_60, %c0_61], %129 {strides = array<i32>} : memref<8x16x32xf32, #tpu.memory_space<vmem>>, vector<1x16x32xf32>,
      %130 = arith.index_cast %54 : i32 to index
      %c0_62 = arith.constant 0 : index
      %c0_63 = arith.constant 0 : index
      %131 = vector.load %arg9[%130, %c0_62, %c0_63] : memref<8x16x32xf32, #tpu.memory_space<vmem>>, vector<1x16x32xf32>
      %132 = vector.shape_cast %131 : vector<1x16x32xf32> to vector<16x32xf32>
      %c1_64 = arith.constant 1 : index
      %c0_65 = arith.constant 0 : index
      %c0_66 = arith.constant 0 : index
      %133 = vector.load %arg7[%c1_64, %c0_65, %c0_66] : memref<2x32x32xf32, #tpu.memory_space<vmem>>, vector<1x32x32xf32>
      %134 = vector.shape_cast %133 : vector<1x32x32xf32> to vector<32x32xf32>
      %cst_67 = arith.constant dense<0.000000e+00> : vector<16x32xf32>
      %135 = tpu.matmul %118, %134, %cst_67 {dimension_numbers = #tpu.dot_dimension_numbers<[1], [0], [0], [1], [0, 0, 1, 1], [], []>} : vector<16x32xf32>, vector<32x32xf32>, vector<16x32xf32> -> vector<16x32xf32>
      %136 = arith.addf %132, %135 : vector<16x32xf32>
      %137 = arith.index_cast %54 : i32 to index
      %c0_68 = arith.constant 0 : index
      %c0_69 = arith.constant 0 : index
      %138 = vector.load %arg9[%137, %c0_68, %c0_69] : memref<8x16x32xf32, #tpu.memory_space<vmem>>, vector<1x16x32xf32>
      %139 = vector.shape_cast %138 : vector<1x16x32xf32> to vector<16x32xf32>
      %140 = vector.shape_cast %136 : vector<16x32xf32> to vector<1x16x32xf32>
      tpu.vector_store %arg9[%137, %c0_68, %c0_69], %140 {strides = array<i32>} : memref<8x16x32xf32, #tpu.memory_space<vmem>>, vector<1x16x32xf32>,
      scf.yield %93, %91, %118, %116 : vector<16x32xf32>, vector<16x32xf32>, vector<16x32xf32>, vector<16x32xf32>
    }
    %c8_i32_35 = arith.constant 8 : i32
    return
  }
  func.func @transform_0(%arg0: i32) -> (i32, i32, i32) {
    %c0_i32 = arith.constant 0 : i32
    %c0_i32_0 = arith.constant 0 : i32
    %c0_i32_1 = arith.constant 0 : i32
    return %c0_i32, %arg0, %c0_i32_0 : i32, i32, i32
  }
  func.func @transform_1(%arg0: i32) -> (i32, i32) {
    %c0_i32 = arith.constant 0 : i32
    %c0_i32_0 = arith.constant 0 : i32
    %c0_i32_1 = arith.constant 0 : i32
    return %c0_i32, %c0_i32_0 : i32, i32
  }
  func.func @transform_2(%arg0: i32) -> (i32, i32) {
    %c0_i32 = arith.constant 0 : i32
    %c0_i32_0 = arith.constant 0 : i32
    %c0_i32_1 = arith.constant 0 : i32
    return %c0_i32, %c0_i32_0 : i32, i32
  }
  func.func @transform_3(%arg0: i32) -> (i32, i32, i32) {
    %c0_i32 = arith.constant 0 : i32
    %c0_i32_0 = arith.constant 0 : i32
    %c0_i32_1 = arith.constant 0 : i32
    %c0_i32_2 = arith.constant 0 : i32
    return %c0_i32, %c0_i32_0, %c0_i32_1 : i32, i32, i32
  }
  func.func @transform_4(%arg0: i32) -> (i32, i32, i32) {
    %c0_i32 = arith.constant 0 : i32
    %c0_i32_0 = arith.constant 0 : i32
    %c0_i32_1 = arith.constant 0 : i32
    %c0_i32_2 = arith.constant 0 : i32
    return %c0_i32, %c0_i32_0, %c0_i32_1 : i32, i32, i32
  }
  func.func @transform_5(%arg0: i32) -> (i32, i32, i32) {
    %c0_i32 = arith.constant 0 : i32
    %c0_i32_0 = arith.constant 0 : i32
    %c0_i32_1 = arith.constant 0 : i32
    %c0_i32_2 = arith.constant 0 : i32
    return %c0_i32, %c0_i32_0, %c0_i32_1 : i32, i32, i32
  }
  func.func @transform_6(%arg0: i32) -> (i32, i32, i32) {
    %c0_i32 = arith.constant 0 : i32
    %c0_i32_0 = arith.constant 0 : i32
    %c0_i32_1 = arith.constant 0 : i32
    %c0_i32_2 = arith.constant 0 : i32
    return %c0_i32, %c0_i32_0, %c0_i32_1 : i32, i32, i32
  }
  func.func @transform_7(%arg0: i32) -> (i32, i32) {
    %c0_i32 = arith.constant 0 : i32
    %c0_i32_0 = arith.constant 0 : i32
    %c0_i32_1 = arith.constant 0 : i32
    return %c0_i32, %c0_i32_0 : i32, i32
  }
  func.func @transform_8(%arg0: i32) -> (i32, i32, i32) {
    %c0_i32 = arith.constant 0 : i32
    %c0_i32_0 = arith.constant 0 : i32
    %c0_i32_1 = arith.constant 0 : i32
    return %c0_i32, %arg0, %c0_i32_0 : i32, i32, i32
  }
}

</mosaic_0001>

<llo_original>
// kernel: seq_band_modelling.4
$region0: #{seq_band_modelling.4}
  #allocation0 [shape = 'u32[]', space=smem, size = 0x4, offset = 0x4, fixed_abs, tag = 'smem constant byte address 0x4 - core index']
  #allocation1 [shape = 'u32[144,128]{1,0:T(1,128)}', space=vmem, size = 0x12000, scoped, tag = 'internal scratch']
  #allocation2 [shape = 'f32[8,16,128]{2,1,0:T(8,128)}', space=vmem, size = 0x10000, scoped, tag = 'scratch operand']
  #allocation3 [shape = 'f32[8,16,128]{2,1,0:T(8,128)}', space=vmem, size = 0x10000, scoped, tag = 'scratch operand']
  %s0 = inlined_call_operand.vmem [shape: f32[8,16,32], index: 0, kind: input, shape index: {}]
  %s1 = inlined_call_operand.vmem [shape: f32[1,32], index: 1, kind: input, shape index: {}]
  %s2 = inlined_call_operand.vmem [shape: f32[1,32], index: 2, kind: input, shape index: {}]
  %s3 = inlined_call_operand.vmem [shape: f32[2,32,128], index: 3, kind: input, shape index: {}]
  %s4 = inlined_call_operand.vmem [shape: f32[2,32,128], index: 4, kind: input, shape index: {}]
  %s5 = inlined_call_operand.vmem [shape: f32[2,1,128], index: 5, kind: input, shape index: {}]
  %s6 = inlined_call_operand.vmem [shape: f32[2,32,32], index: 6, kind: input, shape index: {}]
  %s7 = inlined_call_operand.vmem [shape: f32[1,32], index: 7, kind: input, shape index: {}]
  %s8 = inlined_call_operand.vmem [shape: f32[8,16,32], index: 8, kind: output, shape index: {}]
  %s9 = sld [smem:[#allocation0]]
  $region49: #{seq_band_modelling.4} parent=0
    _
  %s11 = ssub.s32 1, %s9
  %s12 = scalar_select 0, %s11, %s9
  // Predicated region
  $region2: #{seq_band_modelling.4} parent=0 // pred_check
    _
  $region3: #{seq_band_modelling.4} parent=0 // pred_check_branch
    %14 = sbr.rel (0) target = $region5
  $region4: #{seq_band_modelling.4} parent=0 // pred_region
    _
  $region5: #{seq_band_modelling.4} parent=0 // pred_fallthru
    _
  // Predicated region
  $region6: #{seq_band_modelling.4} parent=0 // pred_check
    _
  $region7: #{seq_band_modelling.4} parent=0 // pred_check_branch
    %16 = sbr.rel (0) target = $region9
  $region8: #{seq_band_modelling.4} parent=0 // pred_region
    _
  $region9: #{seq_band_modelling.4} parent=0 // pred_fallthru
    _
  // Predicated region
  $region10: #{seq_band_modelling.4} parent=0 // pred_check
    _
  $region11: #{seq_band_modelling.4} parent=0 // pred_check_branch
    %18 = sbr.rel (0) target = $region13
  $region12: #{seq_band_modelling.4} parent=0 // pred_region
    _
  $region13: #{seq_band_modelling.4} parent=0 // pred_fallthru
    _
  // Predicated region
  $region14: #{seq_band_modelling.4} parent=0 // pred_check
    _
  $region15: #{seq_band_modelling.4} parent=0 // pred_check_branch
    %20 = sbr.rel (0) target = $region17
  $region16: #{seq_band_modelling.4} parent=0 // pred_region
    _
  $region17: #{seq_band_modelling.4} parent=0 // pred_fallthru
    _
  // Predicated region
  $region18: #{seq_band_modelling.4} parent=0 // pred_check
    _
  $region19: #{seq_band_modelling.4} parent=0 // pred_check_branch
    %22 = sbr.rel (0) target = $region21
  $region20: #{seq_band_modelling.4} parent=0 // pred_region
    _
  $region21: #{seq_band_modelling.4} parent=0 // pred_fallthru
    _
  // Predicated region
  $region22: #{seq_band_modelling.4} parent=0 // pred_check
    _
  $region23: #{seq_band_modelling.4} parent=0 // pred_check_branch
    %24 = sbr.rel (0) target = $region25
  $region24: #{seq_band_modelling.4} parent=0 // pred_region
    _
  $region25: #{seq_band_modelling.4} parent=0 // pred_fallthru
    _
  // Predicated region
  $region26: #{seq_band_modelling.4} parent=0 // pred_check
    _
  $region27: #{seq_band_modelling.4} parent=0 // pred_check_branch
    %26 = sbr.rel (0) target = $region29
  $region28: #{seq_band_modelling.4} parent=0 // pred_region
    _
  $region29: #{seq_band_modelling.4} parent=0 // pred_fallthru
    _
  // Predicated region
  $region30: #{seq_band_modelling.4} parent=0 // pred_check
    _
  $region31: #{seq_band_modelling.4} parent=0 // pred_check_branch
    %28 = sbr.rel (0) target = $region33
  $region32: #{seq_band_modelling.4} parent=0 // pred_region
    _
  $region33: #{seq_band_modelling.4} parent=0 // pred_fallthru
    _
  %v29 = vld [vmem:[%s0] sm:$0xff]
  %v30 = vld [vmem:[%s0 + $0x8] sm:$0xff]
  %v31 = vld [vmem:[%s0 + $0x10] sm:$0xff]
  %v32 = vld [vmem:[%s0 + $0x18] sm:$0xff]
  %v33 = vld [vmem:[%s0 + $0x20] sm:$0xff]
  %v34 = vld [vmem:[%s0 + $0x28] sm:$0xff]
  %v35 = vld [vmem:[%s0 + $0x30] sm:$0xff]
  %v36 = vld [vmem:[%s0 + $0x38] sm:$0xff]
  %v37 = vld [vmem:[%s0 + $0x40] sm:$0xff]
  %v38 = vld [vmem:[%s0 + $0x48] sm:$0xff]
  %v39 = vld [vmem:[%s0 + $0x50] sm:$0xff]
  %v40 = vld [vmem:[%s0 + $0x58] sm:$0xff]
  %v41 = vld [vmem:[%s0 + $0x60] sm:$0xff]
  %v42 = vld [vmem:[%s0 + $0x68] sm:$0xff]
  %v43 = vld [vmem:[%s0 + $0x70] sm:$0xff]
  %v44 = vld [vmem:[%s0 + $0x78] sm:$0xff]
  %vm45 = vcmask 261120
  %v46 = vsel %vm45, %v29, 0.0
  %47 = vadd.xlane.f32.xlu0 %v46
  %v48 = vpop.xlane.xlu0 %47
  %v49 = vsel %vm45, %v30, 0.0
  %50 = vadd.xlane.f32.xlu0 %v49
  %v51 = vpop.xlane.xlu0 %50
  %v52 = vsel %vm45, %v31, 0.0
  %53 = vadd.xlane.f32.xlu0 %v52
  %v54 = vpop.xlane.xlu0 %53
  %v55 = vsel %vm45, %v32, 0.0
  %56 = vadd.xlane.f32.xlu0 %v55
  %v57 = vpop.xlane.xlu0 %56
  %v58 = vsel %vm45, %v33, 0.0
  %59 = vadd.xlane.f32.xlu0 %v58
  %v60 = vpop.xlane.xlu0 %59
  %v61 = vsel %vm45, %v34, 0.0
  %62 = vadd.xlane.f32.xlu0 %v61
  %v63 = vpop.xlane.xlu0 %62
  %v64 = vsel %vm45, %v35, 0.0
  %65 = vadd.xlane.f32.xlu0 %v64
  %v66 = vpop.xlane.xlu0 %65
  %v67 = vsel %vm45, %v36, 0.0
  %68 = vadd.xlane.f32.xlu0 %v67
  %v69 = vpop.xlane.xlu0 %68
  %v70 = vsel %vm45, %v37, 0.0
  %71 = vadd.xlane.f32.xlu0 %v70
  %v72 = vpop.xlane.xlu0 %71
  %v73 = vsel %vm45, %v38, 0.0
  %74 = vadd.xlane.f32.xlu0 %v73
  %v75 = vpop.xlane.xlu0 %74
  %v76 = vsel %vm45, %v39, 0.0
  %77 = vadd.xlane.f32.xlu0 %v76
  %v78 = vpop.xlane.xlu0 %77
  %v79 = vsel %vm45, %v40, 0.0
  %80 = vadd.xlane.f32.xlu0 %v79
  %v81 = vpop.xlane.xlu0 %80
  %v82 = vsel %vm45, %v41, 0.0
  %83 = vadd.xlane.f32.xlu0 %v82
  %v84 = vpop.xlane.xlu0 %83
  %v85 = vsel %vm45, %v42, 0.0
  %86 = vadd.xlane.f32.xlu0 %v85
  %v87 = vpop.xlane.xlu0 %86
  %v88 = vsel %vm45, %v43, 0.0
  %89 = vadd.xlane.f32.xlu0 %v88
  %v90 = vpop.xlane.xlu0 %89
  %v91 = vsel %vm45, %v44, 0.0
  %92 = vadd.xlane.f32.xlu0 %v91
  %v93 = vpop.xlane.xlu0 %92
  %v94 = vrcp.pop 32.0
  %v95 = vmul.f32 %v48, %v94
  %v96 = vmul.f32 %v51, %v94
  %v97 = vmul.f32 %v54, %v94
  %v98 = vmul.f32 %v57, %v94
  %v99 = vmul.f32 %v60, %v94
  %v100 = vmul.f32 %v63, %v94
  %v101 = vmul.f32 %v66, %v94
  %v102 = vmul.f32 %v69, %v94
  %v103 = vmul.f32 %v72, %v94
  %v104 = vmul.f32 %v75, %v94
  %v105 = vmul.f32 %v78, %v94
  %v106 = vmul.f32 %v81, %v94
  %v107 = vmul.f32 %v84, %v94
  %v108 = vmul.f32 %v87, %v94
  %v109 = vmul.f32 %v90, %v94
  %v110 = vmul.f32 %v93, %v94
  %v111 = vsub.f32 %v29, %v95
  %v112 = vsub.f32 %v30, %v96
  %v113 = vsub.f32 %v31, %v97
  %v114 = vsub.f32 %v32, %v98
  %v115 = vsub.f32 %v33, %v99
  %v116 = vsub.f32 %v34, %v100
  %v117 = vsub.f32 %v35, %v101
  %v118 = vsub.f32 %v36, %v102
  %v119 = vsub.f32 %v37, %v103
  %v120 = vsub.f32 %v38, %v104
  %v121 = vsub.f32 %v39, %v105
  %v122 = vsub.f32 %v40, %v106
  %v123 = vsub.f32 %v41, %v107
  %v124 = vsub.f32 %v42, %v108
  %v125 = vsub.f32 %v43, %v109
  %v126 = vsub.f32 %v44, %v110
  %v127 = vmul.f32 %v111, %v111
  %v128 = vmul.f32 %v112, %v112
  %v129 = vmul.f32 %v113, %v113
  %v130 = vmul.f32 %v114, %v114
  %v131 = vmul.f32 %v115, %v115
  %v132 = vmul.f32 %v116, %v116
  %v133 = vmul.f32 %v117, %v117
  %v134 = vmul.f32 %v118, %v118
  %v135 = vmul.f32 %v119, %v119
  %v136 = vmul.f32 %v120, %v120
  %v137 = vmul.f32 %v121, %v121
  %v138 = vmul.f32 %v122, %v122
  %v139 = vmul.f32 %v123, %v123
  %v140 = vmul.f32 %v124, %v124
  %v141 = vmul.f32 %v125, %v125
  %v142 = vmul.f32 %v126, %v126
  %v143 = vsel %vm45, %v127, 0.0
  %144 = vadd.xlane.f32.xlu0 %v143
  %v145 = vpop.xlane.xlu0 %144
  %v146 = vsel %vm45, %v128, 0.0
  %147 = vadd.xlane.f32.xlu0 %v146
  %v148 = vpop.xlane.xlu0 %147
  %v149 = vsel %vm45, %v129, 0.0
  %150 = vadd.xlane.f32.xlu0 %v149
  %v151 = vpop.xlane.xlu0 %150
  %v152 = vsel %vm45, %v130, 0.0
  %153 = vadd.xlane.f32.xlu0 %v152
  %v154 = vpop.xlane.xlu0 %153
  %v155 = vsel %vm45, %v131, 0.0
  %156 = vadd.xlane.f32.xlu0 %v155
  %v157 = vpop.xlane.xlu0 %156
  %v158 = vsel %vm45, %v132, 0.0
  %159 = vadd.xlane.f32.xlu0 %v158
  %v160 = vpop.xlane.xlu0 %159
  %v161 = vsel %vm45, %v133, 0.0
  %162 = vadd.xlane.f32.xlu0 %v161
  %v163 = vpop.xlane.xlu0 %162
  %v164 = vsel %vm45, %v134, 0.0
  %165 = vadd.xlane.f32.xlu0 %v164
  %v166 = vpop.xlane.xlu0 %165
  %v167 = vsel %vm45, %v135, 0.0
  %168 = vadd.xlane.f32.xlu0 %v167
  %v169 = vpop.xlane.xlu0 %168
  %v170 = vsel %vm45, %v136, 0.0
  %171 = vadd.xlane.f32.xlu0 %v170
  %v172 = vpop.xlane.xlu0 %171
  %v173 = vsel %vm45, %v137, 0.0
  %174 = vadd.xlane.f32.xlu0 %v173
  %v175 = vpop.xlane.xlu0 %174
  %v176 = vsel %vm45, %v138, 0.0
  %177 = vadd.xlane.f32.xlu0 %v176
  %v178 = vpop.xlane.xlu0 %177
  %v179 = vsel %vm45, %v139, 0.0
  %180 = vadd.xlane.f32.xlu0 %v179
  %v181 = vpop.xlane.xlu0 %180
  %v182 = vsel %vm45, %v140, 0.0
  %183 = vadd.xlane.f32.xlu0 %v182
  %v184 = vpop.xlane.xlu0 %183
  %v185 = vsel %vm45, %v141, 0.0
  %186 = vadd.xlane.f32.xlu0 %v185
  %v187 = vpop.xlane.xlu0 %186
  %v188 = vsel %vm45, %v142, 0.0
  %189 = vadd.xlane.f32.xlu0 %v188
  %v190 = vpop.xlane.xlu0 %189
  %v191 = vmul.f32 %v145, %v94
  %v192 = vmul.f32 %v148, %v94
  %v193 = vmul.f32 %v151, %v94
  %v194 = vmul.f32 %v154, %v94
  %v195 = vmul.f32 %v157, %v94
  %v196 = vmul.f32 %v160, %v94
  %v197 = vmul.f32 %v163, %v94
  %v198 = vmul.f32 %v166, %v94
  %v199 = vmul.f32 %v169, %v94
  %v200 = vmul.f32 %v172, %v94
  %v201 = vmul.f32 %v175, %v94
  %v202 = vmul.f32 %v178, %v94
  %v203 = vmul.f32 %v181, %v94
  %v204 = vmul.f32 %v184, %v94
  %v205 = vmul.f32 %v187, %v94
  %v206 = vmul.f32 %v190, %v94
  %v207 = vadd.f32 %v191, 1e-05
  %v208 = vadd.f32 %v192, 1e-05
  %v209 = vadd.f32 %v193, 1e-05
  %v210 = vadd.f32 %v194, 1e-05
  %v211 = vadd.f32 %v195, 1e-05
  %v212 = vadd.f32 %v196, 1e-05
  %v213 = vadd.f32 %v197, 1e-05
  %v214 = vadd.f32 %v198, 1e-05
  %v215 = vadd.f32 %v199, 1e-05
  %v216 = vadd.f32 %v200, 1e-05
  %v217 = vadd.f32 %v201, 1e-05
  %v218 = vadd.f32 %v202, 1e-05
  %v219 = vadd.f32 %v203, 1e-05
  %v220 = vadd.f32 %v204, 1e-05
  %v221 = vadd.f32 %v205, 1e-05
  %v222 = vadd.f32 %v206, 1e-05
  %v223 = vrsqrt.pop %v207
  %v224 = vrsqrt.pop %v208
  %v225 = vrsqrt.pop %v209
  %v226 = vrsqrt.pop %v210
  %v227 = vrsqrt.pop %v211
  %v228 = vrsqrt.pop %v212
  %v229 = vrsqrt.pop %v213
  %v230 = vrsqrt.pop %v214
  %v231 = vrsqrt.pop %v215
  %v232 = vrsqrt.pop %v216
  %v233 = vrsqrt.pop %v217
  %v234 = vrsqrt.pop %v218
  %v235 = vrsqrt.pop %v219
  %v236 = vrsqrt.pop %v220
  %v237 = vrsqrt.pop %v221
  %v238 = vrsqrt.pop %v222
  %v239 = vmul.f32 %v111, %v223
  %v240 = vmul.f32 %v112, %v224
  %v241 = vmul.f32 %v113, %v225
  %v242 = vmul.f32 %v114, %v226
  %v243 = vmul.f32 %v115, %v227
  %v244 = vmul.f32 %v116, %v228
  %v245 = vmul.f32 %v117, %v229
  %v246 = vmul.f32 %v118, %v230
  %v247 = vmul.f32 %v119, %v231
  %v248 = vmul.f32 %v120, %v232
  %v249 = vmul.f32 %v121, %v233
  %v250 = vmul.f32 %v122, %v234
  %v251 = vmul.f32 %v123, %v235
  %v252 = vmul.f32 %v124, %v236
  %v253 = vmul.f32 %v125, %v237
  %v254 = vmul.f32 %v126, %v238
  %v255 = vld [vmem:[%s1] sm:$0x1]
  %v257 = vlaneseq
  %v258 = vshrl.u32 %v257, 7
  %v259 = vsub.s32 0, %v258
  %v260 = vrot.slane %v255, %v259
  %v262 = vmul.f32 %v239, %v260
  %v263 = vmul.f32 %v240, %v260
  %v264 = vmul.f32 %v241, %v260
  %v265 = vmul.f32 %v242, %v260
  %v266 = vmul.f32 %v243, %v260
  %v267 = vmul.f32 %v244, %v260
  %v268 = vmul.f32 %v245, %v260
  %v269 = vmul.f32 %v246, %v260
  %v270 = vmul.f32 %v247, %v260
  %v271 = vmul.f32 %v248, %v260
  %v272 = vmul.f32 %v249, %v260
  %v273 = vmul.f32 %v250, %v260
  %v274 = vmul.f32 %v251, %v260
  %v275 = vmul.f32 %v252, %v260
  %v276 = vmul.f32 %v253, %v260
  %v277 = vmul.f32 %v254, %v260
  %v278 = vld [vmem:[%s2] sm:$0x1]
  %v280 = vlaneseq
  %v281 = vshrl.u32 %v280, 7
  %v282 = vsub.s32 0, %v281
  %v283 = vrot.slane %v278, %v282
  %v285 = vadd.f32 %v262, %v283
  %v286 = vadd.f32 %v263, %v283
  %v287 = vadd.f32 %v264, %v283
  %v288 = vadd.f32 %v265, %v283
  %v289 = vadd.f32 %v266, %v283
  %v290 = vadd.f32 %v267, %v283
  %v291 = vadd.f32 %v268, %v283
  %v292 = vadd.f32 %v269, %v283
  %v293 = vadd.f32 %v270, %v283
  %v294 = vadd.f32 %v271, %v283
  %v295 = vadd.f32 %v272, %v283
  %v296 = vadd.f32 %v273, %v283
  %v297 = vadd.f32 %v274, %v283
  %v298 = vadd.f32 %v275, %v283
  %v299 = vadd.f32 %v276, %v283
  %v300 = vadd.f32 %v277, %v283
  %v301 = vld [vmem:[%s3] sm:$0xff]
  %v302 = vld [vmem:[%s3 + $0x8] sm:$0xff]
  %v303 = vld [vmem:[%s3 + $0x10] sm:$0xff]
  %v304 = vld [vmem:[%s3 + $0x18] sm:$0xff]
  %v305 = vld [vmem:[%s5] sm:$0x1]
  %v307 = vlaneseq
  %v308 = vshrl.u32 %v307, 7
  %v309 = vsub.s32 0, %v308
  %v310 = vrot.slane %v305, %v309
  %v313 = vsel %vm45, %v285, 0
  %v316 = vsel %vm45, %v286, 0
  %v319 = vsel %vm45, %v287, 0
  %v322 = vsel %vm45, %v288, 0
  %v325 = vsel %vm45, %v289, 0
  %v328 = vsel %vm45, %v290, 0
  %v331 = vsel %vm45, %v291, 0
  %v334 = vsel %vm45, %v292, 0
  %v337 = vsel %vm45, %v293, 0
  %v340 = vsel %vm45, %v294, 0
  %v343 = vsel %vm45, %v295, 0
  %v346 = vsel %vm45, %v296, 0
  %v349 = vsel %vm45, %v297, 0
  %v352 = vsel %vm45, %v298, 0
  %v355 = vsel %vm45, %v299, 0
  %v358 = vsel %vm45, %v300, 0
  %360 = vmatprep.subr.mxu0 0.0
  %361 = vmatpush1.msra.mxu0 0.0
  %362 = vmatprep.subr.mxu0 0.0
  %363 = vmatpush1.msra.mxu0 0.0
  %364 = vmatprep.subr.mxu0 0.0
  %365 = vmatpush1.msra.mxu0 0.0
  %366 = vmatprep.subr.mxu0 0.0
  %367 = vmatpush1.msra.mxu0 0.0
  %368 = vmatprep.subr.mxu0 0.0
  %369 = vmatpush1.msra.mxu0 0.0
  %370 = vmatprep.subr.mxu0 0.0
  %371 = vmatpush1.msra.mxu0 0.0
  %372 = vmatprep.subr.mxu0 0.0
  %373 = vmatpush1.msra.mxu0 0.0
  %374 = vmatprep.subr.mxu0 0.0
  %375 = vmatpush1.msra.mxu0 0.0
  %376 = vmatprep.subr.mxu0 0.0
  %377 = vmatpush1.msra.mxu0 0.0
  %378 = vmatprep.subr.mxu0 0.0
  %379 = vmatpush1.msra.mxu0 0.0
  %380 = vmatprep.subr.mxu0 0.0
  %381 = vmatpush1.msra.mxu0 0.0
  %382 = vmatprep.subr.mxu0 0.0
  %383 = vmatpush1.msra.mxu0 0.0
  %384 = vmatprep.subr.mxu0 0.0
  %385 = vmatpush1.msra.mxu0 %v304
  %386 = vmatprep.subr.mxu0 0.0
  %387 = vmatpush1.msra.mxu0 %v303
  %388 = vmatprep.subr.mxu0 0.0
  %389 = vmatpush1.msra.mxu0 %v302
  %390 = vmatprep.subr.mxu0 0.0
  %391 = vmatpush1.msra.mxu0 %v301
  %392 = vmatprep.subr.mxu0 0.0
  %393 = vmatpush2.msra.mxu0 0.0
  %394 = vmatprep.subr.mxu0 0.0
  %395 = vmatpush2.msra.mxu0 0.0
  %396 = vmatprep.subr.mxu0 0.0
  %397 = vmatpush2.msra.mxu0 0.0
  %398 = vmatprep.subr.mxu0 0.0
  %399 = vmatpush2.msra.mxu0 0.0
  %400 = vmatprep.subr.mxu0 0.0
  %401 = vmatpush2.msra.mxu0 0.0
  %402 = vmatprep.subr.mxu0 0.0
  %403 = vmatpush2.msra.mxu0 0.0
  %404 = vmatprep.subr.mxu0 0.0
  %405 = vmatpush2.msra.mxu0 0.0
  %406 = vmatprep.subr.mxu0 0.0
  %407 = vmatpush2.msra.mxu0 0.0
  %408 = vmatprep.subr.mxu0 0.0
  %409 = vmatpush2.msra.mxu0 0.0
  %410 = vmatprep.subr.mxu0 0.0
  %411 = vmatpush2.msra.mxu0 0.0
  %412 = vmatprep.subr.mxu0 0.0
  %413 = vmatpush2.msra.mxu0 0.0
  %414 = vmatprep.subr.mxu0 0.0
  %415 = vmatpush2.msra.mxu0 0.0
  %416 = vmatprep.subr.mxu0 0.0
  %417 = vmatpush2.msra.mxu0 0.0
  %418 = vmatprep.subr.mxu0 0.0
  %419 = vmatpush2.msra.mxu0 0.0
  %420 = vmatprep.subr.mxu0 0.0
  %421 = vmatpush2.msra.mxu0 0.0
  %422 = vmatprep.subr.mxu0 0.0
  %423 = vmatpush2.msra.mxu0 0.0
  %424 = vmatprep.mubr.f32.mxu0 0.0
  %425 = vmatmul.mubr.f32.gmra.mxu0 %v313
  %v426 = vpop.f32.mrf.mxu0
  %v427 = vadd.f32 %v310, %v426
  %v428 = vpop.f32.mrf.mxu0
  %429 = vmatprep.mubr.f32.mxu0 0.0
  %430 = vmatmul.mubr.f32.gmra.mxu0 %v316
  %v431 = vpop.f32.mrf.mxu0
  %v432 = vadd.f32 %v310, %v431
  %v433 = vpop.f32.mrf.mxu0
  %434 = vmatprep.mubr.f32.mxu0 0.0
  %435 = vmatmul.mubr.f32.gmra.mxu0 %v319
  %v436 = vpop.f32.mrf.mxu0
  %v437 = vadd.f32 %v310, %v436
  %v438 = vpop.f32.mrf.mxu0
  %439 = vmatprep.mubr.f32.mxu0 0.0
  %440 = vmatmul.mubr.f32.gmra.mxu0 %v322
  %v441 = vpop.f32.mrf.mxu0
  %v442 = vadd.f32 %v310, %v441
  %v443 = vpop.f32.mrf.mxu0
  %444 = vmatprep.mubr.f32.mxu0 0.0
  %445 = vmatmul.mubr.f32.gmra.mxu0 %v325
  %v446 = vpop.f32.mrf.mxu0
  %v447 = vadd.f32 %v310, %v446
  %v448 = vpop.f32.mrf.mxu0
  %449 = vmatprep.mubr.f32.mxu0 0.0
  %450 = vmatmul.mubr.f32.gmra.mxu0 %v328
  %v451 = vpop.f32.mrf.mxu0
  %v452 = vadd.f32 %v310, %v451
  %v453 = vpop.f32.mrf.mxu0
  %454 = vmatprep.mubr.f32.mxu0 0.0
  %455 = vmatmul.mubr.f32.gmra.mxu0 %v331
  %v456 = vpop.f32.mrf.mxu0
  %v457 = vadd.f32 %v310, %v456
  %v458 = vpop.f32.mrf.mxu0
  %459 = vmatprep.mubr.f32.mxu0 0.0
  %460 = vmatmul.mubr.f32.gmra.mxu0 %v334
  %v461 = vpop.f32.mrf.mxu0
  %v462 = vadd.f32 %v310, %v461
  %v463 = vpop.f32.mrf.mxu0
  %464 = vmatprep.mubr.f32.mxu0 0.0
  %465 = vmatmul.mubr.f32.gmra.mxu0 %v337
  %v466 = vpop.f32.mrf.mxu0
  %v467 = vadd.f32 %v310, %v466
  %v468 = vpop.f32.mrf.mxu0
  %469 = vmatprep.mubr.f32.mxu0 0.0
  %470 = vmatmul.mubr.f32.gmra.mxu0 %v340
  %v471 = vpop.f32.mrf.mxu0
  %v472 = vadd.f32 %v310, %v471
  %v473 = vpop.f32.mrf.mxu0
  %474 = vmatprep.mubr.f32.mxu0 0.0
  %475 = vmatmul.mubr.f32.gmra.mxu0 %v343
  %v476 = vpop.f32.mrf.mxu0
  %v477 = vadd.f32 %v310, %v476
  %v478 = vpop.f32.mrf.mxu0
  %479 = vmatprep.mubr.f32.mxu0 0.0
  %480 = vmatmul.mubr.f32.gmra.mxu0 %v346
  %v481 = vpop.f32.mrf.mxu0
  %v482 = vadd.f32 %v310, %v481
  %v483 = vpop.f32.mrf.mxu0
  %484 = vmatprep.mubr.f32.mxu0 0.0
  %485 = vmatmul.mubr.f32.gmra.mxu0 %v349
  %v486 = vpop.f32.mrf.mxu0
  %v487 = vadd.f32 %v310, %v486
  %v488 = vpop.f32.mrf.mxu0
  %489 = vmatprep.mubr.f32.mxu0 0.0
  %490 = vmatmul.mubr.f32.gmra.mxu0 %v352
  %v491 = vpop.f32.mrf.mxu0
  %v492 = vadd.f32 %v310, %v491
  %v493 = vpop.f32.mrf.mxu0
  %494 = vmatprep.mubr.f32.mxu0 0.0
  %495 = vmatmul.mubr.f32.gmra.mxu0 %v355
  %v496 = vpop.f32.mrf.mxu0
  %v497 = vadd.f32 %v310, %v496
  %v498 = vpop.f32.mrf.mxu0
  %499 = vmatprep.mubr.f32.mxu0 0.0
  %500 = vmatmul.mubr.f32.gmra.mxu0 %v358
  %v501 = vpop.f32.mrf.mxu0
  %v502 = vadd.f32 %v310, %v501
  %v503 = vpop.f32.mrf.mxu0
  %504 = vdwg.mxu0
  %s505 = scalar_lea.vmem %s3, 32
  %v506 = vld [vmem:[%s505] sm:$0xff]
  %v507 = vld [vmem:[%s505 + $0x8] sm:$0xff]
  %v508 = vld [vmem:[%s505 + $0x10] sm:$0xff]
  %v509 = vld [vmem:[%s505 + $0x18] sm:$0xff]
  %s510 = scalar_lea.vmem %s5, 1
  %v511 = vld [vmem:[%s510] sm:$0x1]
  %v513 = vlaneseq
  %v514 = vshrl.u32 %v513, 7
  %v515 = vsub.s32 0, %v514
  %v516 = vrot.slane %v511, %v515
  %518 = vmatprep.subr.mxu0 0.0
  %519 = vmatpush1.msra.mxu0 0.0
  %520 = vmatprep.subr.mxu0 0.0
  %521 = vmatpush1.msra.mxu0 0.0
  %522 = vmatprep.subr.mxu0 0.0
  %523 = vmatpush1.msra.mxu0 0.0
  %524 = vmatprep.subr.mxu0 0.0
  %525 = vmatpush1.msra.mxu0 0.0
  %526 = vmatprep.subr.mxu0 0.0
  %527 = vmatpush1.msra.mxu0 0.0
  %528 = vmatprep.subr.mxu0 0.0
  %529 = vmatpush1.msra.mxu0 0.0
  %530 = vmatprep.subr.mxu0 0.0
  %531 = vmatpush1.msra.mxu0 0.0
  %532 = vmatprep.subr.mxu0 0.0
  %533 = vmatpush1.msra.mxu0 0.0
  %534 = vmatprep.subr.mxu0 0.0
  %535 = vmatpush1.msra.mxu0 0.0
  %536 = vmatprep.subr.mxu0 0.0
  %537 = vmatpush1.msra.mxu0 0.0
  %538 = vmatprep.subr.mxu0 0.0
  %539 = vmatpush1.msra.mxu0 0.0
  %540 = vmatprep.subr.mxu0 0.0
  %541 = vmatpush1.msra.mxu0 0.0
  %542 = vmatprep.subr.mxu0 0.0
  %543 = vmatpush1.msra.mxu0 %v509
  %544 = vmatprep.subr.mxu0 0.0
  %545 = vmatpush1.msra.mxu0 %v508
  %546 = vmatprep.subr.mxu0 0.0
  %547 = vmatpush1.msra.mxu0 %v507
  %548 = vmatprep.subr.mxu0 0.0
  %549 = vmatpush1.msra.mxu0 %v506
  %550 = vmatprep.subr.mxu0 0.0
  %551 = vmatpush2.msra.mxu0 0.0
  %552 = vmatprep.subr.mxu0 0.0
  %553 = vmatpush2.msra.mxu0 0.0
  %554 = vmatprep.subr.mxu0 0.0
  %555 = vmatpush2.msra.mxu0 0.0
  %556 = vmatprep.subr.mxu0 0.0
  %557 = vmatpush2.msra.mxu0 0.0
  %558 = vmatprep.subr.mxu0 0.0
  %559 = vmatpush2.msra.mxu0 0.0
  %560 = vmatprep.subr.mxu0 0.0
  %561 = vmatpush2.msra.mxu0 0.0
  %562 = vmatprep.subr.mxu0 0.0
  %563 = vmatpush2.msra.mxu0 0.0
  %564 = vmatprep.subr.mxu0 0.0
  %565 = vmatpush2.msra.mxu0 0.0
  %566 = vmatprep.subr.mxu0 0.0
  %567 = vmatpush2.msra.mxu0 0.0
  %568 = vmatprep.subr.mxu0 0.0
  %569 = vmatpush2.msra.mxu0 0.0
  %570 = vmatprep.subr.mxu0 0.0
  %571 = vmatpush2.msra.mxu0 0.0
  %572 = vmatprep.subr.mxu0 0.0
  %573 = vmatpush2.msra.mxu0 0.0
  %574 = vmatprep.subr.mxu0 0.0
  %575 = vmatpush2.msra.mxu0 0.0
  %576 = vmatprep.subr.mxu0 0.0
  %577 = vmatpush2.msra.mxu0 0.0
  %578 = vmatprep.subr.mxu0 0.0
  %579 = vmatpush2.msra.mxu0 0.0
  %580 = vmatprep.subr.mxu0 0.0
  %581 = vmatpush2.msra.mxu0 0.0
  %582 = vmatprep.mubr.f32.mxu0 0.0
  %583 = vmatmul.mubr.f32.gmra.mxu0 %v313
  %v584 = vpop.f32.mrf.mxu0
  %v585 = vadd.f32 %v516, %v584
  %v586 = vpop.f32.mrf.mxu0
  %587 = vmatprep.mubr.f32.mxu0 0.0
  %588 = vmatmul.mubr.f32.gmra.mxu0 %v316
  %v589 = vpop.f32.mrf.mxu0
  %v590 = vadd.f32 %v516, %v589
  %v591 = vpop.f32.mrf.mxu0
  %592 = vmatprep.mubr.f32.mxu0 0.0
  %593 = vmatmul.mubr.f32.gmra.mxu0 %v319
  %v594 = vpop.f32.mrf.mxu0
  %v595 = vadd.f32 %v516, %v594
  %v596 = vpop.f32.mrf.mxu0
  %597 = vmatprep.mubr.f32.mxu0 0.0
  %598 = vmatmul.mubr.f32.gmra.mxu0 %v322
  %v599 = vpop.f32.mrf.mxu0
  %v600 = vadd.f32 %v516, %v599
  %v601 = vpop.f32.mrf.mxu0
  %602 = vmatprep.mubr.f32.mxu0 0.0
  %603 = vmatmul.mubr.f32.gmra.mxu0 %v325
  %v604 = vpop.f32.mrf.mxu0
  %v605 = vadd.f32 %v516, %v604
  %v606 = vpop.f32.mrf.mxu0
  %607 = vmatprep.mubr.f32.mxu0 0.0
  %608 = vmatmul.mubr.f32.gmra.mxu0 %v328
  %v609 = vpop.f32.mrf.mxu0
  %v610 = vadd.f32 %v516, %v609
  %v611 = vpop.f32.mrf.mxu0
  %612 = vmatprep.mubr.f32.mxu0 0.0
  %613 = vmatmul.mubr.f32.gmra.mxu0 %v331
  %v614 = vpop.f32.mrf.mxu0
  %v615 = vadd.f32 %v516, %v614
  %v616 = vpop.f32.mrf.mxu0
  %617 = vmatprep.mubr.f32.mxu0 0.0
  %618 = vmatmul.mubr.f32.gmra.mxu0 %v334
  %v619 = vpop.f32.mrf.mxu0
  %v620 = vadd.f32 %v516, %v619
  %v621 = vpop.f32.mrf.mxu0
  %622 = vmatprep.mubr.f32.mxu0 0.0
  %623 = vmatmul.mubr.f32.gmra.mxu0 %v337
  %v624 = vpop.f32.mrf.mxu0
  %v625 = vadd.f32 %v516, %v624
  %v626 = vpop.f32.mrf.mxu0
  %627 = vmatprep.mubr.f32.mxu0 0.0
  %628 = vmatmul.mubr.f32.gmra.mxu0 %v340
  %v629 = vpop.f32.mrf.mxu0
  %v630 = vadd.f32 %v516, %v629
  %v631 = vpop.f32.mrf.mxu0
  %632 = vmatprep.mubr.f32.mxu0 0.0
  %633 = vmatmul.mubr.f32.gmra.mxu0 %v343
  %v634 = vpop.f32.mrf.mxu0
  %v635 = vadd.f32 %v516, %v634
  %v636 = vpop.f32.mrf.mxu0
  %637 = vmatprep.mubr.f32.mxu0 0.0
  %638 = vmatmul.mubr.f32.gmra.mxu0 %v346
  %v639 = vpop.f32.mrf.mxu0
  %v640 = vadd.f32 %v516, %v639
  %v641 = vpop.f32.mrf.mxu0
  %642 = vmatprep.mubr.f32.mxu0 0.0
  %643 = vmatmul.mubr.f32.gmra.mxu0 %v349
  %v644 = vpop.f32.mrf.mxu0
  %v645 = vadd.f32 %v516, %v644
  %v646 = vpop.f32.mrf.mxu0
  %647 = vmatprep.mubr.f32.mxu0 0.0
  %648 = vmatmul.mubr.f32.gmra.mxu0 %v352
  %v649 = vpop.f32.mrf.mxu0
  %v650 = vadd.f32 %v516, %v649
  %v651 = vpop.f32.mrf.mxu0
  %652 = vmatprep.mubr.f32.mxu0 0.0
  %653 = vmatmul.mubr.f32.gmra.mxu0 %v355
  %v654 = vpop.f32.mrf.mxu0
  %v655 = vadd.f32 %v516, %v654
  %v656 = vpop.f32.mrf.mxu0
  %657 = vmatprep.mubr.f32.mxu0 0.0
  %658 = vmatmul.mubr.f32.gmra.mxu0 %v358
  %v659 = vpop.f32.mrf.mxu0
  %v660 = vadd.f32 %v516, %v659
  %v661 = vpop.f32.mrf.mxu0
  %662 = vdwg.mxu0
  %663 = vst [vmem:[#allocation2] sm:$0xff] %v427
  %664 = vst [vmem:[#allocation2 + $0x8] sm:$0xff] %v432
  %665 = vst [vmem:[#allocation2 + $0x10] sm:$0xff] %v437
  %666 = vst [vmem:[#allocation2 + $0x18] sm:$0xff] %v442
  %667 = vst [vmem:[#allocation2 + $0x20] sm:$0xff] %v447
  %668 = vst [vmem:[#allocation2 + $0x28] sm:$0xff] %v452
  %669 = vst [vmem:[#allocation2 + $0x30] sm:$0xff] %v457
  %670 = vst [vmem:[#allocation2 + $0x38] sm:$0xff] %v462
  %671 = vst [vmem:[#allocation2 + $0x40] sm:$0xff] %v467
  %672 = vst [vmem:[#allocation2 + $0x48] sm:$0xff] %v472
  %673 = vst [vmem:[#allocation2 + $0x50] sm:$0xff] %v477
  %674 = vst [vmem:[#allocation2 + $0x58] sm:$0xff] %v482
  %675 = vst [vmem:[#allocation2 + $0x60] sm:$0xff] %v487
  %676 = vst [vmem:[#allocation2 + $0x68] sm:$0xff] %v492
  %677 = vst [vmem:[#allocation2 + $0x70] sm:$0xff] %v497
  %678 = vst [vmem:[#allocation2 + $0x78] sm:$0xff] %v502
  %679 = vst [vmem:[#allocation3] sm:$0xff] %v585
  %680 = vst [vmem:[#allocation3 + $0x8] sm:$0xff] %v590
  %681 = vst [vmem:[#allocation3 + $0x10] sm:$0xff] %v595
  %682 = vst [vmem:[#allocation3 + $0x18] sm:$0xff] %v600
  %683 = vst [vmem:[#allocation3 + $0x20] sm:$0xff] %v605
  %684 = vst [vmem:[#allocation3 + $0x28] sm:$0xff] %v610
  %685 = vst [vmem:[#allocation3 + $0x30] sm:$0xff] %v615
  %686 = vst [vmem:[#allocation3 + $0x38] sm:$0xff] %v620
  %687 = vst [vmem:[#allocation3 + $0x40] sm:$0xff] %v625
  %688 = vst [vmem:[#allocation3 + $0x48] sm:$0xff] %v630
  %689 = vst [vmem:[#allocation3 + $0x50] sm:$0xff] %v635
  %690 = vst [vmem:[#allocation3 + $0x58] sm:$0xff] %v640
  %691 = vst [vmem:[#allocation3 + $0x60] sm:$0xff] %v645
  %692 = vst [vmem:[#allocation3 + $0x68] sm:$0xff] %v650
  %693 = vst [vmem:[#allocation3 + $0x70] sm:$0xff] %v655
  %694 = vst [vmem:[#allocation3 + $0x78] sm:$0xff] %v660
  %v695 = vld [vmem:[%s7] sm:$0x1]
  %v697 = vlaneseq
  %v698 = vshrl.u32 %v697, 7
  %v699 = vsub.s32 0, %v698
  %v700 = vrot.slane %v695, %v699
  %v702 = vadd.f32 %v29, %v700
  %v703 = vadd.f32 %v30, %v700
  %v704 = vadd.f32 %v31, %v700
  %v705 = vadd.f32 %v32, %v700
  %v706 = vadd.f32 %v33, %v700
  %v707 = vadd.f32 %v34, %v700
  %v708 = vadd.f32 %v35, %v700
  %v709 = vadd.f32 %v36, %v700
  %v710 = vadd.f32 %v37, %v700
  %v711 = vadd.f32 %v38, %v700
  %v712 = vadd.f32 %v39, %v700
  %v713 = vadd.f32 %v40, %v700
  %v714 = vadd.f32 %v41, %v700
  %v715 = vadd.f32 %v42, %v700
  %v716 = vadd.f32 %v43, %v700
  %v717 = vadd.f32 %v44, %v700
  %718 = vst.msk [vmem:[%s8] sm:$0xff] %vm45, %v702
  %719 = vst.msk [vmem:[%s8 + $0x8] sm:$0xff] %vm45, %v703
  %720 = vst.msk [vmem:[%s8 + $0x10] sm:$0xff] %vm45, %v704
  %721 = vst.msk [vmem:[%s8 + $0x18] sm:$0xff] %vm45, %v705
  %722 = vst.msk [vmem:[%s8 + $0x20] sm:$0xff] %vm45, %v706
  %723 = vst.msk [vmem:[%s8 + $0x28] sm:$0xff] %vm45, %v707
  %724 = vst.msk [vmem:[%s8 + $0x30] sm:$0xff] %vm45, %v708
  %725 = vst.msk [vmem:[%s8 + $0x38] sm:$0xff] %vm45, %v709
  %726 = vst.msk [vmem:[%s8 + $0x40] sm:$0xff] %vm45, %v710
  %727 = vst.msk [vmem:[%s8 + $0x48] sm:$0xff] %vm45, %v711
  %728 = vst.msk [vmem:[%s8 + $0x50] sm:$0xff] %vm45, %v712
  %729 = vst.msk [vmem:[%s8 + $0x58] sm:$0xff] %vm45, %v713
  %730 = vst.msk [vmem:[%s8 + $0x60] sm:$0xff] %vm45, %v714
  %731 = vst.msk [vmem:[%s8 + $0x68] sm:$0xff] %vm45, %v715
  %732 = vst.msk [vmem:[%s8 + $0x70] sm:$0xff] %vm45, %v716
  %733 = vst.msk [vmem:[%s8 + $0x78] sm:$0xff] %vm45, %v717
  loop: start=0, step=1, limit=8
  $region34: #{seq_band_modelling.4} parent=0 // loop_pre_header
    _
  $region35: #{seq_band_modelling.4} parent=0 // loop_header
    %s735 = sphi 0, %s739
    %p736 = scmp.ge.s32.totalorder %s735, 8
    %v740 = vphi 0.0, %v986
    %v741 = vphi 0.0, %v987
    %v742 = vphi 0.0, %v974
    %v743 = vphi 0.0, %v975
    %v744 = vphi 0.0, %v1034
    %v745 = vphi 0.0, %v1035
    %v746 = vphi 0.0, %v1022
    %v747 = vphi 0.0, %v1023
  $region36: #{seq_band_modelling.4} parent=0 // loop_header_branch
    %738 = sbr.rel (%p736) target = $region40
  $region37: #{seq_band_modelling.4} parent=0 // loop_body
    %s748 = ssub.s32 7, %s735
    %s749 = smul.u32 %s735, 16
    %s750 = scalar_lea.vmem [#allocation2], %s749
    %v751 = vld [vmem:[%s750] sm:$0xff]
    %v752 = vld [vmem:[%s750 + $0x8] sm:$0xff]
    %v753 = vld [vmem:[%s4] sm:$0xff]
    %v754 = vld [vmem:[%s4 + $0x8] sm:$0xff]
    %v755 = vld [vmem:[%s4 + $0x10] sm:$0xff]
    %v756 = vld [vmem:[%s4 + $0x18] sm:$0xff]
    %759 = vrot.lane.b32.xlu0 %v740, 32
    %v760 = vpop.permute.xlu0 %759
    %761 = vrot.lane.b32.xlu0 %v741, 32
    %v762 = vpop.permute.xlu0 %761
    %v763 = vsel %vm45, %v760, 0
    %v765 = vsel %vm45, %v762, 0
    %767 = vmatprep.subr.mxu0 0.0
    %768 = vmatpush1.msra.mxu0 0.0
    %769 = vmatprep.subr.mxu0 0.0
    %770 = vmatpush1.msra.mxu0 0.0
    %771 = vmatprep.subr.mxu0 0.0
    %772 = vmatpush1.msra.mxu0 0.0
    %773 = vmatprep.subr.mxu0 0.0
    %774 = vmatpush1.msra.mxu0 0.0
    %775 = vmatprep.subr.mxu0 0.0
    %776 = vmatpush1.msra.mxu0 0.0
    %777 = vmatprep.subr.mxu0 0.0
    %778 = vmatpush1.msra.mxu0 0.0
    %779 = vmatprep.subr.mxu0 0.0
    %780 = vmatpush1.msra.mxu0 0.0
    %781 = vmatprep.subr.mxu0 0.0
    %782 = vmatpush1.msra.mxu0 0.0
    %783 = vmatprep.subr.mxu0 0.0
    %784 = vmatpush1.msra.mxu0 0.0
    %785 = vmatprep.subr.mxu0 0.0
    %786 = vmatpush1.msra.mxu0 0.0
    %787 = vmatprep.subr.mxu0 0.0
    %788 = vmatpush1.msra.mxu0 0.0
    %789 = vmatprep.subr.mxu0 0.0
    %790 = vmatpush1.msra.mxu0 0.0
    %791 = vmatprep.subr.mxu0 0.0
    %792 = vmatpush1.msra.mxu0 %v756
    %793 = vmatprep.subr.mxu0 0.0
    %794 = vmatpush1.msra.mxu0 %v755
    %795 = vmatprep.subr.mxu0 0.0
    %796 = vmatpush1.msra.mxu0 %v754
    %797 = vmatprep.subr.mxu0 0.0
    %798 = vmatpush1.msra.mxu0 %v753
    %799 = vmatprep.subr.mxu0 0.0
    %800 = vmatpush2.msra.mxu0 0.0
    %801 = vmatprep.subr.mxu0 0.0
    %802 = vmatpush2.msra.mxu0 0.0
    %803 = vmatprep.subr.mxu0 0.0
    %804 = vmatpush2.msra.mxu0 0.0
    %805 = vmatprep.subr.mxu0 0.0
    %806 = vmatpush2.msra.mxu0 0.0
    %807 = vmatprep.subr.mxu0 0.0
    %808 = vmatpush2.msra.mxu0 0.0
    %809 = vmatprep.subr.mxu0 0.0
    %810 = vmatpush2.msra.mxu0 0.0
    %811 = vmatprep.subr.mxu0 0.0
    %812 = vmatpush2.msra.mxu0 0.0
    %813 = vmatprep.subr.mxu0 0.0
    %814 = vmatpush2.msra.mxu0 0.0
    %815 = vmatprep.subr.mxu0 0.0
    %816 = vmatpush2.msra.mxu0 0.0
    %817 = vmatprep.subr.mxu0 0.0
    %818 = vmatpush2.msra.mxu0 0.0
    %819 = vmatprep.subr.mxu0 0.0
    %820 = vmatpush2.msra.mxu0 0.0
    %821 = vmatprep.subr.mxu0 0.0
    %822 = vmatpush2.msra.mxu0 0.0
    %823 = vmatprep.subr.mxu0 0.0
    %824 = vmatpush2.msra.mxu0 0.0
    %825 = vmatprep.subr.mxu0 0.0
    %826 = vmatpush2.msra.mxu0 0.0
    %827 = vmatprep.subr.mxu0 0.0
    %828 = vmatpush2.msra.mxu0 0.0
    %829 = vmatprep.subr.mxu0 0.0
    %830 = vmatpush2.msra.mxu0 0.0
    %831 = vmatprep.mubr.f32.mxu0 0.0
    %832 = vmatmul.mubr.f32.gmra.mxu0 %v763
    %v833 = vpop.f32.mrf.mxu0
    %v834 = vadd.f32 0.0, %v833
    %v835 = vpop.f32.mrf.mxu0
    %836 = vmatprep.mubr.f32.mxu0 0.0
    %837 = vmatmul.mubr.f32.gmra.mxu0 %v765
    %v838 = vpop.f32.mrf.mxu0
    %v839 = vadd.f32 0.0, %v838
    %v840 = vpop.f32.mrf.mxu0
    %841 = vdwg.mxu0
    %v842 = vadd.f32 %v751, %v834
    %v843 = vadd.f32 %v752, %v839
    %s844 = smul.u32 %s748, 16
    %s845 = scalar_lea.vmem [#allocation3], %s844
    %v846 = vld [vmem:[%s845] sm:$0xff]
    %v847 = vld [vmem:[%s845 + $0x8] sm:$0xff]
    %s848 = scalar_lea.vmem %s4, 32
    %v849 = vld [vmem:[%s848] sm:$0xff]
    %v850 = vld [vmem:[%s848 + $0x8] sm:$0xff]
    %v851 = vld [vmem:[%s848 + $0x10] sm:$0xff]
    %v852 = vld [vmem:[%s848 + $0x18] sm:$0xff]
    %855 = vrot.lane.b32.xlu0 %v744, 32
    %v856 = vpop.permute.xlu0 %855
    %857 = vrot.lane.b32.xlu0 %v745, 32
    %v858 = vpop.permute.xlu0 %857
    %v859 = vsel %vm45, %v856, 0
    %v861 = vsel %vm45, %v858, 0
    %863 = vmatprep.subr.mxu0 0.0
    %864 = vmatpush1.msra.mxu0 0.0
    %865 = vmatprep.subr.mxu0 0.0
    %866 = vmatpush1.msra.mxu0 0.0
    %867 = vmatprep.subr.mxu0 0.0
    %868 = vmatpush1.msra.mxu0 0.0
    %869 = vmatprep.subr.mxu0 0.0
    %870 = vmatpush1.msra.mxu0 0.0
    %871 = vmatprep.subr.mxu0 0.0
    %872 = vmatpush1.msra.mxu0 0.0
    %873 = vmatprep.subr.mxu0 0.0
    %874 = vmatpush1.msra.mxu0 0.0
    %875 = vmatprep.subr.mxu0 0.0
    %876 = vmatpush1.msra.mxu0 0.0
    %877 = vmatprep.subr.mxu0 0.0
    %878 = vmatpush1.msra.mxu0 0.0
    %879 = vmatprep.subr.mxu0 0.0
    %880 = vmatpush1.msra.mxu0 0.0
    %881 = vmatprep.subr.mxu0 0.0
    %882 = vmatpush1.msra.mxu0 0.0
    %883 = vmatprep.subr.mxu0 0.0
    %884 = vmatpush1.msra.mxu0 0.0
    %885 = vmatprep.subr.mxu0 0.0
    %886 = vmatpush1.msra.mxu0 0.0
    %887 = vmatprep.subr.mxu0 0.0
    %888 = vmatpush1.msra.mxu0 %v852
    %889 = vmatprep.subr.mxu0 0.0
    %890 = vmatpush1.msra.mxu0 %v851
    %891 = vmatprep.subr.mxu0 0.0
    %892 = vmatpush1.msra.mxu0 %v850
    %893 = vmatprep.subr.mxu0 0.0
    %894 = vmatpush1.msra.mxu0 %v849
    %895 = vmatprep.subr.mxu0 0.0
    %896 = vmatpush2.msra.mxu0 0.0
    %897 = vmatprep.subr.mxu0 0.0
    %898 = vmatpush2.msra.mxu0 0.0
    %899 = vmatprep.subr.mxu0 0.0
    %900 = vmatpush2.msra.mxu0 0.0
    %901 = vmatprep.subr.mxu0 0.0
    %902 = vmatpush2.msra.mxu0 0.0
    %903 = vmatprep.subr.mxu0 0.0
    %904 = vmatpush2.msra.mxu0 0.0
    %905 = vmatprep.subr.mxu0 0.0
    %906 = vmatpush2.msra.mxu0 0.0
    %907 = vmatprep.subr.mxu0 0.0
    %908 = vmatpush2.msra.mxu0 0.0
    %909 = vmatprep.subr.mxu0 0.0
    %910 = vmatpush2.msra.mxu0 0.0
    %911 = vmatprep.subr.mxu0 0.0
    %912 = vmatpush2.msra.mxu0 0.0
    %913 = vmatprep.subr.mxu0 0.0
    %914 = vmatpush2.msra.mxu0 0.0
    %915 = vmatprep.subr.mxu0 0.0
    %916 = vmatpush2.msra.mxu0 0.0
    %917 = vmatprep.subr.mxu0 0.0
    %918 = vmatpush2.msra.mxu0 0.0
    %919 = vmatprep.subr.mxu0 0.0
    %920 = vmatpush2.msra.mxu0 0.0
    %921 = vmatprep.subr.mxu0 0.0
    %922 = vmatpush2.msra.mxu0 0.0
    %923 = vmatprep.subr.mxu0 0.0
    %924 = vmatpush2.msra.mxu0 0.0
    %925 = vmatprep.subr.mxu0 0.0
    %926 = vmatpush2.msra.mxu0 0.0
    %927 = vmatprep.mubr.f32.mxu0 0.0
    %928 = vmatmul.mubr.f32.gmra.mxu0 %v859
    %v929 = vpop.f32.mrf.mxu0
    %v930 = vadd.f32 0.0, %v929
    %v931 = vpop.f32.mrf.mxu0
    %932 = vmatprep.mubr.f32.mxu0 0.0
    %933 = vmatmul.mubr.f32.gmra.mxu0 %v861
    %v934 = vpop.f32.mrf.mxu0
    %v935 = vadd.f32 0.0, %v934
    %v936 = vpop.f32.mrf.mxu0
    %937 = vdwg.mxu0
    %v938 = vadd.f32 %v846, %v930
    %v939 = vadd.f32 %v847, %v935
    %v940 = vxor.u32 %v842, 2147483648
    %v941 = vxor.u32 %v843, 2147483648
    %v942 = vmul.f32 %v940, 1.442695
    %v943 = vpow.pop %v942
    %v944 = vmul.f32 %v941, 1.442695
    %v945 = vpow.pop %v944
    %v946 = vadd.f32 %v943, 1.0
    %v947 = vadd.f32 %v945, 1.0
    %v948 = vrcp.pop %v946
    %v949 = vmul.f32 1.0, %v948
    %v950 = vrcp.pop %v947
    %v951 = vmul.f32 1.0, %v950
    %v952 = vtanh.pop %v842
    %v953 = vtanh.pop %v843
    %v954 = vmul.f32 %v949, %v742
    %v955 = vmul.f32 %v951, %v743
    %958 = vrot.lane.b32.xlu0 %v952, 64
    %v959 = vpop.permute.xlu0 %958
    %960 = vrot.lane.b32.xlu0 %v953, 64
    %v961 = vpop.permute.xlu0 %960
    %v964 = vmul.f32 %v949, %v959
    %v965 = vmul.f32 %v951, %v961
    %968 = vrot.lane.b32.xlu0 %v964, 32
    %v969 = vpop.permute.xlu0 %968
    %970 = vrot.lane.b32.xlu0 %v965, 32
    %v971 = vpop.permute.xlu0 %970
    %v974 = vadd.f32 %v954, %v969
    %v975 = vadd.f32 %v955, %v971
    %v976 = vtanh.pop %v974
    %v977 = vtanh.pop %v975
    %980 = vrot.lane.b32.xlu0 %v976, 64
    %v981 = vpop.permute.xlu0 %980
    %982 = vrot.lane.b32.xlu0 %v977, 64
    %v983 = vpop.permute.xlu0 %982
    %v986 = vmul.f32 %v949, %v981
    %v987 = vmul.f32 %v951, %v983
    %v988 = vxor.u32 %v938, 2147483648
    %v989 = vxor.u32 %v939, 2147483648
    %v990 = vmul.f32 %v988, 1.442695
    %v991 = vpow.pop %v990
    %v992 = vmul.f32 %v989, 1.442695
    %v993 = vpow.pop %v992
    %v994 = vadd.f32 %v991, 1.0
    %v995 = vadd.f32 %v993, 1.0
    %v996 = vrcp.pop %v994
    %v997 = vmul.f32 1.0, %v996
    %v998 = vrcp.pop %v995
    %v999 = vmul.f32 1.0, %v998
    %v1000 = vtanh.pop %v938
    %v1001 = vtanh.pop %v939
    %v1002 = vmul.f32 %v997, %v746
    %v1003 = vmul.f32 %v999, %v747
    %1006 = vrot.lane.b32.xlu0 %v1000, 64
    %v1007 = vpop.permute.xlu0 %1006
    %1008 = vrot.lane.b32.xlu0 %v1001, 64
    %v1009 = vpop.permute.xlu0 %1008
    %v1012 = vmul.f32 %v997, %v1007
    %v1013 = vmul.f32 %v999, %v1009
    %1016 = vrot.lane.b32.xlu0 %v1012, 32
    %v1017 = vpop.permute.xlu0 %1016
    %1018 = vrot.lane.b32.xlu0 %v1013, 32
    %v1019 = vpop.permute.xlu0 %1018
    %v1022 = vadd.f32 %v1002, %v1017
    %v1023 = vadd.f32 %v1003, %v1019
    %v1024 = vtanh.pop %v1022
    %v1025 = vtanh.pop %v1023
    %1028 = vrot.lane.b32.xlu0 %v1024, 64
    %v1029 = vpop.permute.xlu0 %1028
    %1030 = vrot.lane.b32.xlu0 %v1025, 64
    %v1031 = vpop.permute.xlu0 %1030
    %v1034 = vmul.f32 %v997, %v1029
    %v1035 = vmul.f32 %v999, %v1031
    %s1036 = scalar_lea.vmem %s8, %s749
    %v1037 = vld [vmem:[%s1036] sm:$0xff]
    %v1038 = vld [vmem:[%s1036 + $0x8] sm:$0xff]
    %v1039 = vld [vmem:[%s6] sm:$0xff]
    %v1040 = vld [vmem:[%s6 + $0x8] sm:$0xff]
    %v1041 = vld [vmem:[%s6 + $0x10] sm:$0xff]
    %v1042 = vld [vmem:[%s6 + $0x18] sm:$0xff]
    %1045 = vrot.lane.b32.xlu0 %v986, 32
    %v1046 = vpop.permute.xlu0 %1045
    %1047 = vrot.lane.b32.xlu0 %v987, 32
    %v1048 = vpop.permute.xlu0 %1047
    %v1049 = vsel %vm45, %v1046, 0
    %v1051 = vsel %vm45, %v1048, 0
    %1053 = vmatprep.subr.mxu0 0.0
    %1054 = vmatpush1.msra.mxu0 0.0
    %1055 = vmatprep.subr.mxu0 0.0
    %1056 = vmatpush1.msra.mxu0 0.0
    %1057 = vmatprep.subr.mxu0 0.0
    %1058 = vmatpush1.msra.mxu0 0.0
    %1059 = vmatprep.subr.mxu0 0.0
    %1060 = vmatpush1.msra.mxu0 0.0
    %1061 = vmatprep.subr.mxu0 0.0
    %1062 = vmatpush1.msra.mxu0 0.0
    %1063 = vmatprep.subr.mxu0 0.0
    %1064 = vmatpush1.msra.mxu0 0.0
    %1065 = vmatprep.subr.mxu0 0.0
    %1066 = vmatpush1.msra.mxu0 0.0
    %1067 = vmatprep.subr.mxu0 0.0
    %1068 = vmatpush1.msra.mxu0 0.0
    %1069 = vmatprep.subr.mxu0 0.0
    %1070 = vmatpush1.msra.mxu0 0.0
    %1071 = vmatprep.subr.mxu0 0.0
    %1072 = vmatpush1.msra.mxu0 0.0
    %1073 = vmatprep.subr.mxu0 0.0
    %1074 = vmatpush1.msra.mxu0 0.0
    %1075 = vmatprep.subr.mxu0 0.0
    %1076 = vmatpush1.msra.mxu0 0.0
    %1077 = vmatprep.subr.mxu0 0.0
    %1078 = vmatpush1.msra.mxu0 %v1042
    %1079 = vmatprep.subr.mxu0 0.0
    %1080 = vmatpush1.msra.mxu0 %v1041
    %1081 = vmatprep.subr.mxu0 0.0
    %1082 = vmatpush1.msra.mxu0 %v1040
    %1083 = vmatprep.subr.mxu0 0.0
    %1084 = vmatpush1.msra.mxu0 %v1039
    %1085 = vmatprep.subr.mxu0 0.0
    %1086 = vmatpush2.msra.mxu0 0.0
    %1087 = vmatprep.subr.mxu0 0.0
    %1088 = vmatpush2.msra.mxu0 0.0
    %1089 = vmatprep.subr.mxu0 0.0
    %1090 = vmatpush2.msra.mxu0 0.0
    %1091 = vmatprep.subr.mxu0 0.0
    %1092 = vmatpush2.msra.mxu0 0.0
    %1093 = vmatprep.subr.mxu0 0.0
    %1094 = vmatpush2.msra.mxu0 0.0
    %1095 = vmatprep.subr.mxu0 0.0
    %1096 = vmatpush2.msra.mxu0 0.0
    %1097 = vmatprep.subr.mxu0 0.0
    %1098 = vmatpush2.msra.mxu0 0.0
    %1099 = vmatprep.subr.mxu0 0.0
    %1100 = vmatpush2.msra.mxu0 0.0
    %1101 = vmatprep.subr.mxu0 0.0
    %1102 = vmatpush2.msra.mxu0 0.0
    %1103 = vmatprep.subr.mxu0 0.0
    %1104 = vmatpush2.msra.mxu0 0.0
    %1105 = vmatprep.subr.mxu0 0.0
    %1106 = vmatpush2.msra.mxu0 0.0
    %1107 = vmatprep.subr.mxu0 0.0
    %1108 = vmatpush2.msra.mxu0 0.0
    %1109 = vmatprep.subr.mxu0 0.0
    %1110 = vmatpush2.msra.mxu0 0.0
    %1111 = vmatprep.subr.mxu0 0.0
    %1112 = vmatpush2.msra.mxu0 0.0
    %1113 = vmatprep.subr.mxu0 0.0
    %1114 = vmatpush2.msra.mxu0 0.0
    %1115 = vmatprep.subr.mxu0 0.0
    %1116 = vmatpush2.msra.mxu0 0.0
    %1117 = vmatprep.mubr.f32.mxu0 0.0
    %1118 = vmatmul.mubr.f32.gmra.mxu0 %v1049
    %v1119 = vpop.f32.mrf.mxu0
    %v1120 = vadd.f32 0.0, %v1119
    %v1121 = vpop.f32.mrf.mxu0
    %1122 = vmatprep.mubr.f32.mxu0 0.0
    %1123 = vmatmul.mubr.f32.gmra.mxu0 %v1051
    %v1124 = vpop.f32.mrf.mxu0
    %v1125 = vadd.f32 0.0, %v1124
    %v1126 = vpop.f32.mrf.mxu0
    %1127 = vdwg.mxu0
    %v1128 = vadd.f32 %v1037, %v1120
    %v1129 = vadd.f32 %v1038, %v1125
    %1130 = vst.msk [vmem:[%s1036] sm:$0xff] %vm45, %v1128
    %1131 = vst.msk [vmem:[%s1036 + $0x8] sm:$0xff] %vm45, %v1129
    %s1132 = scalar_lea.vmem %s8, %s844
    %v1133 = vld [vmem:[%s1132] sm:$0xff]
    %v1134 = vld [vmem:[%s1132 + $0x8] sm:$0xff]
    %s1135 = scalar_lea.vmem %s6, 32
    %v1136 = vld [vmem:[%s1135] sm:$0xff]
    %v1137 = vld [vmem:[%s1135 + $0x8] sm:$0xff]
    %v1138 = vld [vmem:[%s1135 + $0x10] sm:$0xff]
    %v1139 = vld [vmem:[%s1135 + $0x18] sm:$0xff]
    %1142 = vrot.lane.b32.xlu0 %v1034, 32
    %v1143 = vpop.permute.xlu0 %1142
    %1144 = vrot.lane.b32.xlu0 %v1035, 32
    %v1145 = vpop.permute.xlu0 %1144
    %v1146 = vsel %vm45, %v1143, 0
    %v1148 = vsel %vm45, %v1145, 0
    %1150 = vmatprep.subr.mxu0 0.0
    %1151 = vmatpush1.msra.mxu0 0.0
    %1152 = vmatprep.subr.mxu0 0.0
    %1153 = vmatpush1.msra.mxu0 0.0
    %1154 = vmatprep.subr.mxu0 0.0
    %1155 = vmatpush1.msra.mxu0 0.0
    %1156 = vmatprep.subr.mxu0 0.0
    %1157 = vmatpush1.msra.mxu0 0.0
    %1158 = vmatprep.subr.mxu0 0.0
    %1159 = vmatpush1.msra.mxu0 0.0
    %1160 = vmatprep.subr.mxu0 0.0
    %1161 = vmatpush1.msra.mxu0 0.0
    %1162 = vmatprep.subr.mxu0 0.0
    %1163 = vmatpush1.msra.mxu0 0.0
    %1164 = vmatprep.subr.mxu0 0.0
    %1165 = vmatpush1.msra.mxu0 0.0
    %1166 = vmatprep.subr.mxu0 0.0
    %1167 = vmatpush1.msra.mxu0 0.0
    %1168 = vmatprep.subr.mxu0 0.0
    %1169 = vmatpush1.msra.mxu0 0.0
    %1170 = vmatprep.subr.mxu0 0.0
    %1171 = vmatpush1.msra.mxu0 0.0
    %1172 = vmatprep.subr.mxu0 0.0
    %1173 = vmatpush1.msra.mxu0 0.0
    %1174 = vmatprep.subr.mxu0 0.0
    %1175 = vmatpush1.msra.mxu0 %v1139
    %1176 = vmatprep.subr.mxu0 0.0
    %1177 = vmatpush1.msra.mxu0 %v1138
    %1178 = vmatprep.subr.mxu0 0.0
    %1179 = vmatpush1.msra.mxu0 %v1137
    %1180 = vmatprep.subr.mxu0 0.0
    %1181 = vmatpush1.msra.mxu0 %v1136
    %1182 = vmatprep.subr.mxu0 0.0
    %1183 = vmatpush2.msra.mxu0 0.0
    %1184 = vmatprep.subr.mxu0 0.0
    %1185 = vmatpush2.msra.mxu0 0.0
    %1186 = vmatprep.subr.mxu0 0.0
    %1187 = vmatpush2.msra.mxu0 0.0
    %1188 = vmatprep.subr.mxu0 0.0
    %1189 = vmatpush2.msra.mxu0 0.0
    %1190 = vmatprep.subr.mxu0 0.0
    %1191 = vmatpush2.msra.mxu0 0.0
    %1192 = vmatprep.subr.mxu0 0.0
    %1193 = vmatpush2.msra.mxu0 0.0
    %1194 = vmatprep.subr.mxu0 0.0
    %1195 = vmatpush2.msra.mxu0 0.0
    %1196 = vmatprep.subr.mxu0 0.0
    %1197 = vmatpush2.msra.mxu0 0.0
    %1198 = vmatprep.subr.mxu0 0.0
    %1199 = vmatpush2.msra.mxu0 0.0
    %1200 = vmatprep.subr.mxu0 0.0
    %1201 = vmatpush2.msra.mxu0 0.0
    %1202 = vmatprep.subr.mxu0 0.0
    %1203 = vmatpush2.msra.mxu0 0.0
    %1204 = vmatprep.subr.mxu0 0.0
    %1205 = vmatpush2.msra.mxu0 0.0
    %1206 = vmatprep.subr.mxu0 0.0
    %1207 = vmatpush2.msra.mxu0 0.0
    %1208 = vmatprep.subr.mxu0 0.0
    %1209 = vmatpush2.msra.mxu0 0.0
    %1210 = vmatprep.subr.mxu0 0.0
    %1211 = vmatpush2.msra.mxu0 0.0
    %1212 = vmatprep.subr.mxu0 0.0
    %1213 = vmatpush2.msra.mxu0 0.0
    %1214 = vmatprep.mubr.f32.mxu0 0.0
    %1215 = vmatmul.mubr.f32.gmra.mxu0 %v1146
    %v1216 = vpop.f32.mrf.mxu0
    %v1217 = vadd.f32 0.0, %v1216
    %v1218 = vpop.f32.mrf.mxu0
    %1219 = vmatprep.mubr.f32.mxu0 0.0
    %1220 = vmatmul.mubr.f32.gmra.mxu0 %v1148
    %v1221 = vpop.f32.mrf.mxu0
    %v1222 = vadd.f32 0.0, %v1221
    %v1223 = vpop.f32.mrf.mxu0
    %1224 = vdwg.mxu0
    %v1225 = vadd.f32 %v1133, %v1217
    %v1226 = vadd.f32 %v1134, %v1222
    %1227 = vst.msk [vmem:[%s1132] sm:$0xff] %vm45, %v1225
    %1228 = vst.msk [vmem:[%s1132 + $0x8] sm:$0xff] %vm45, %v1226
  $region38: #{seq_band_modelling.4} parent=0 // loop_footer
    %s739 = sadd.s32 1, %s735
  $region39: #{seq_band_modelling.4} parent=0 // loop_footer_branch
    %734 = sbr.rel target = $region35
  $region40: #{seq_band_modelling.4} parent=0 // loop_exit
    _
  // Predicated region
  $region41: #{seq_band_modelling.4} parent=0 // pred_check
    _
  $region42: #{seq_band_modelling.4} parent=0 // pred_check_branch
    %1230 = sbr.rel (0) target = $region44
  $region43: #{seq_band_modelling.4} parent=0 // pred_region
    _
  $region44: #{seq_band_modelling.4} parent=0 // pred_fallthru
    _
  // Predicated region
  $region45: #{seq_band_modelling.4} parent=0 // pred_check
    _
  $region46: #{seq_band_modelling.4} parent=0 // pred_check_branch
    %1232 = sbr.rel (0) target = $region48
  $region47: #{seq_band_modelling.4} parent=0 // pred_region
    _
  $region48: #{seq_band_modelling.4} parent=0 // pred_fallthru
    _

</llo_original>
